<compile_context>
chip_gen: v7x
topology: tpu7x:2x2x1
jax: 0.10.0
libtpu: 0.0.40
codegen_flags: <defaults>
</compile_context>

<pallas_src>
import functools
import math
import numpy as np

import jax
import jax.numpy as jnp
from jax.experimental import pallas as pl
from jax.experimental.pallas import tpu as pltpu


# ------------------------------------------------------------------
# host-side static helpers (index maps, resizes, blur matrices)
# ------------------------------------------------------------------
def _nearest_idx(out_n, in_n):
    """PyTorch F.interpolate(mode='nearest') index map: src = floor(dst*in/out)."""
    return (np.arange(out_n) * in_n) // out_n


def _round_up(n, m):
    return ((n + m - 1) // m) * m


def _nearest_take(x, idx, axis):
    """Nearest-neighbour gather along one axis with fast paths:
       identity, strided slice (integer downsample), broadcast (integer upsample)."""
    idx = np.asarray(idx, dtype=np.int64)
    axis = axis % x.ndim
    n_in = x.shape[axis]
    n_out = len(idx)
    if n_out == n_in and np.array_equal(idx, np.arange(n_in)):
        return x
    # integer-factor (or composed integer) downsample -> strided slice
    if n_out >= 1 and idx[0] == 0:
        s = int(idx[1] - idx[0]) if n_out > 1 else 1
        if s >= 1 and (n_out - 1) * s < n_in and np.array_equal(idx, np.arange(n_out) * s):
            return jax.lax.slice_in_dim(x, 0, (n_out - 1) * s + 1, stride=s, axis=axis)
    # integer-factor nearest upsample -> broadcast + reshape (no gather)
    if n_in > 0 and n_out % n_in == 0:
        f = n_out // n_in
        if np.array_equal(idx, np.repeat(np.arange(n_in), f)):
            x_exp = jnp.expand_dims(x, axis + 1)
            tgt = x.shape[:axis + 1] + (f,) + x.shape[axis + 1:]
            new_shape = x.shape[:axis] + (n_out,) + x.shape[axis + 1:]
            return jnp.broadcast_to(x_exp, tgt).reshape(new_shape)
    # general fallback (non-integer scale factors) — rare
    return jnp.take(x, jnp.asarray(idx, dtype=jnp.int32), axis=axis)


def take_hw(x, hidx, widx):
    x = _nearest_take(x, hidx, axis=x.ndim - 2)
    return _nearest_take(x, widx, axis=x.ndim - 1)


def nearest_resize(x, out_h, out_w):
    in_h, in_w = x.shape[-2], x.shape[-1]
    return take_hw(x, _nearest_idx(out_h, in_h), _nearest_idx(out_w, in_w))


def gaussian_blur_matrix_np(n, sigma, truncate=3):
    """Row-blur matrix equivalent to a 1D gaussian conv with replicate padding."""
    # TODO(synk): verify replicate (edge-clamped) padding matches deepgaze's
    # GaussianFilterNd boundary handling exactly.
    radius = int(np.ceil(truncate * sigma))
    offsets = np.arange(2 * radius + 1) - radius
    kern = np.exp(-0.5 * (offsets / float(sigma)) ** 2)
    kern = kern / kern.sum()
    M = np.zeros((n, n), dtype=np.float32)
    rows = np.arange(n)[:, None]
    cols = np.clip(rows + offsets[None, :], 0, n - 1)
    np.add.at(M, (np.broadcast_to(rows, cols.shape), cols),
              np.broadcast_to(kern[None, :], cols.shape))
    return M


@functools.lru_cache(maxsize=None)
def _blur_resize_mats(rh, rw, rh_p, rw_p, h2, w2, sigma, truncate=3):
    """Gaussian blur matrices with the readout->(h2,w2) nearest resize folded in,
       zero-padded along the contraction dims (rh_p, rw_p) for aligned MXU tiles."""
    # TODO(synk): for very large center-bias maps (h2,w2 >~ 512) use the band
    # structure / separable-conv form instead of dense O(n^2) matrices.
    GH = gaussian_blur_matrix_np(h2, sigma, truncate)            # (h2, h2)
    GW = gaussian_blur_matrix_np(w2, sigma, truncate)            # (w2, w2)
    Rh = np.zeros((h2, rh), dtype=np.float32)
    Rh[np.arange(h2), _nearest_idx(h2, rh)] = 1.0
    Rw = np.zeros((w2, rw), dtype=np.float32)
    Rw[np.arange(w2), _nearest_idx(w2, rw)] = 1.0
    GH_r = np.zeros((h2, rh_p), dtype=np.float32)
    GH_r[:, :rh] = GH @ Rh
    GWt_r = np.zeros((rw_p, w2), dtype=np.float32)
    GWt_r[:rw, :] = (GW @ Rw).T
    return jnp.asarray(GH_r), jnp.asarray(GWt_r)


def _upsample_log_counts(out_n, in_n):
    """log(#destination pixels mapping to each source pixel) for nearest upsample."""
    cnt = np.bincount(_nearest_idx(out_n, in_n), minlength=in_n).astype(np.float64)
    return np.log(cnt).astype(np.float32)


# ------------------------------------------------------------------
# in-kernel math helpers
# ------------------------------------------------------------------
def _softplus(x):
    # PyTorch softplus (beta=1, threshold=20)
    return jnp.where(x > 20.0, x, jnp.log1p(jnp.exp(jnp.minimum(x, 20.0))))


def _floordiv_const(a, d):
    """Exact floor(a/d) for non-negative int32 vectors and static positive int d,
       using only VPU-friendly ops (float mul/floor + integer fixup)."""
    if d == 1:
        return a
    af = a.astype(jnp.float32)
    q = jnp.floor((af + 0.5) * (1.0 / float(d))).astype(jnp.int32)
    one = jnp.ones_like(q)
    zero = jnp.zeros_like(q)
    q = q - jnp.where(q * d > a, one, zero)
    q = q + jnp.where((q + 1) * d <= a, one, zero)
    return q


def _scaled_floordiv(a, mul, div):
    """floor(a*mul/div) for non-negative int32 vectors, static ints mul, div."""
    if mul % div == 0:
        return a * (mul // div)
    return _floordiv_const(a * mul, div)


# ------------------------------------------------------------------
# weight slab: all 1x1-conv weights/biases packed into one VMEM-friendly array
# ------------------------------------------------------------------
def _pad8(n):
    return _round_up(n, 8)


def build_readout_slab(params, n_fix):
    """Packs every readout weight (Cout, Cin) + bias into one (rows, 17) f32 slab.
       Each weight occupies rows [r0, r0+Cout), cols [0, Cin); its bias (if any)
       sits in column Cin of the same rows.  Returns (slab, offsets)."""
    F = n_fix
    T = jnp.transpose
    f1w, f1b = params["feat1"]
    f2w, f2b = params["feat2"]
    s0w, s0bias = params["sal"][0]
    s1w, s1b = params["sal"][1]
    s2w, s2b = params["sal"][2]
    spw, spb = params["scan"][0]
    fx1w, fx1bias = params["fixsel"][0]
    fx2w, fx2b = params["fixsel"][1]

    z83 = jnp.zeros((8, 3), jnp.float32)
    s0t, spt, fx1t = T(s0w), T(spw), T(fx1w)
    entries = [
        # feature branches act on the stacked 6-channel input (zero-padded halves)
        ("f1", jnp.concatenate([T(f1w), z83], axis=1), f1b),
        ("f2", jnp.concatenate([z83, T(f2w)], axis=1), f2b),
        ("s0a", s0t[:, :8], s0bias),
        ("s0b", s0t[:, 8:], None),
        ("s1", T(s1w), s1b),
        ("s2", T(s2w), s2b),
        ("spx", spt[:, :F], spb),
        ("spy", spt[:, F:2 * F], None),
        ("spd", spt[:, 2 * F:], None),
        ("fxa", fx1t[:, :1], fx1bias),
        ("fxb", fx1t[:, 1:], None),
        ("fx2", T(fx2w), fx2b),
    ]
    ncols = max(int(w.shape[1]) + 1 for _, w, _ in entries)
    nrows = sum(_pad8(int(w.shape[0])) for _, w, _ in entries)
    slab = jnp.zeros((nrows, ncols), jnp.float32)
    offsets = {}
    r0 = 0
    for name, w, b in entries:
        co, ci = int(w.shape[0]), int(w.shape[1])
        slab = slab.at[r0:r0 + co, 0:ci].set(w.astype(jnp.float32))
        if b is not None:
            slab = slab.at[r0:r0 + co, ci:ci + 1].set(
                jnp.reshape(b, (-1, 1)).astype(jnp.float32))
        offsets[name] = (r0, co, ci)
        r0 += _pad8(co)
    return slab, offsets


# ------------------------------------------------------------------
# Pallas kernel 1: fused readout stack (channel-major, pixels on lanes,
#                  scanpath features computed in-kernel)
# ------------------------------------------------------------------
def _make_readout_kernel(offsets, F, TP, rh, rw, H, W):
    O = dict(offsets)
    f32 = jnp.float32

    def kernel(hist_ref, x_ref, slab_ref, out_ref):
        def wmat(name, dtype=None):
            r0, co, ci = O[name]
            m = slab_ref[r0:r0 + co, 0:ci]
            return m.astype(dtype) if dtype is not None else m

        def bias(name):
            r0, co, ci = O[name]
            return slab_ref[r0:r0 + co, ci:ci + 1]

        x = x_ref[0]            # (6, TP) bf16 — stacked branch-1 / branch-2 pixels
        hist = hist_ref[0]      # (2F, 1) f32  — [x_hist ; y_hist]

        # ---- frozen feature branches (1x1 conv + ReLU), bf16 MXU ----
        feat1 = jnp.maximum(
            jnp.dot(wmat("f1", jnp.bfloat16), x, preferred_element_type=f32)
            + bias("f1"), 0.0)                                     # (8, TP)
        feat2 = jnp.maximum(
            jnp.dot(wmat("f2", jnp.bfloat16), x, preferred_element_type=f32)
            + bias("f2"), 0.0)                                     # (8, TP)

        # ---- saliency network (channel concat done as split matmuls) ----
        h = _softplus(jnp.dot(wmat("s0a"), feat1, preferred_element_type=f32)
                      + jnp.dot(wmat("s0b"), feat2, preferred_element_type=f32)
                      + bias("s0a"))                               # (16, TP)
        h = _softplus(jnp.dot(wmat("s1"), h, preferred_element_type=f32)
                      + bias("s1"))                                # (8, TP)
        sal = _softplus(jnp.dot(wmat("s2"), h, preferred_element_type=f32)
                        + bias("s2"))                              # (1, TP)

        # ---- scanpath features computed in-kernel (no HBM (B,3F,P) tensor) ----
        t = pl.program_id(1)
        p = t * TP + jax.lax.broadcasted_iota(jnp.int32, (1, TP), 1)   # pixel id
        row = _floordiv_const(p, rw)
        col = p - row * rw
        ycoord = _scaled_floordiv(row, H, rh).astype(f32)          # (1, TP)
        xcoord = _scaled_floordiv(col, W, rw).astype(f32)          # (1, TP)
        xh = hist[0:F, :]                                          # (F, 1)
        yh = hist[F:2 * F, :]                                      # (F, 1)
        XS = xcoord - xh                                           # (F, TP)
        YS = ycoord - yh                                           # (F, TP)
        D = jnp.sqrt(XS * XS + YS * YS)                            # (F, TP)  (EUP)

        spf = _softplus(jnp.dot(wmat("spx"), XS, preferred_element_type=f32)
                        + jnp.dot(wmat("spy"), YS, preferred_element_type=f32)
                        + jnp.dot(wmat("spd"), D, preferred_element_type=f32)
                        + bias("spx"))                             # (16, TP)

        # ---- fixation selection on concat(sal, spf): K=1 part as broadcast-FMA ----
        g = _softplus(wmat("fxa") * sal
                      + jnp.dot(wmat("fxb"), spf, preferred_element_type=f32)
                      + bias("fxa"))                               # (16, TP)
        out = jnp.dot(wmat("fx2"), g, preferred_element_type=f32) + bias("fx2")
        out_ref[0] = out                                           # (1, TP)

    return kernel


def _choose_tp(P):
    """VMEM-budgeted pixel-tile size; keeps >=2 tiles where possible (megacore)."""
    if P <= 128:
        return 128
    if P >= 4096:
        return 2048
    half = -(-P // 2)
    return max(128, min(2048, _round_up(half, 128)))


def fused_readout(hist, x6, slab, offsets, *, F, TP, rh, rw, H, W):
    B, C2, P_pad = x6.shape
    ntiles = P_pad // TP
    kernel = _make_readout_kernel(offsets, F, TP, rh, rw, H, W)
    return pl.pallas_call(
        kernel,
        grid=(B, ntiles),
        in_specs=[
            pl.BlockSpec((1, 2 * F, 1), lambda b, t: (b, 0, 0)),   # fixation history
            pl.BlockSpec((1, C2, TP), lambda b, t: (b, 0, t)),     # stacked bf16 pixels
            pl.BlockSpec(slab.shape, lambda b, t: (0, 0)),         # constant weight slab
        ],
        out_specs=pl.BlockSpec((1, 1, TP), lambda b, t: (b, 0, t)),
        out_shape=jax.ShapeDtypeStruct((B, 1, P_pad), jnp.float32),
        compiler_params=pltpu.CompilerParams(
            dimension_semantics=("parallel", "parallel"),
            vmem_limit_bytes=28 * 1024 * 1024),
    )(hist, x6, slab)


# ------------------------------------------------------------------
# Pallas kernel 2: Finalizer — (resize∘blur) as matmuls + weighted center bias
#                  + exact logsumexp normalization via replication counts
# ------------------------------------------------------------------
def _finalize_kernel(cbw_ref, r_ref, gh_ref, gwt_ref, cb_ref, lch_ref, lcw_ref, o_ref):
    x = r_ref[0]                                                          # (rh_p, rw_p)
    tmp = jnp.dot(x, gwt_ref[...], preferred_element_type=jnp.float32)        # (rh_p, w2)
    blurred = jnp.dot(gh_ref[...], tmp, preferred_element_type=jnp.float32)   # (h2, w2)
    out = blurred + cbw_ref[0] * cb_ref[0]
    # logsumexp over the FULL-resolution map, computed exactly on the downsampled
    # map by folding in the nearest-upsample replication counts.
    z = out + lch_ref[...] + lcw_ref[...]
    m = jnp.max(z)
    lse = m + jnp.log(jnp.sum(jnp.exp(z - m)))
    o_ref[0] = out - lse


def finalize(readout_pad, cb_ds, GH_r, GWt_r, cbw, lch, lcw):
    B, rh_p, rw_p = readout_pad.shape
    h2, w2 = cb_ds.shape[1], cb_ds.shape[2]
    return pl.pallas_call(
        _finalize_kernel,
        grid=(B,),
        in_specs=[
            pl.BlockSpec(memory_space=pltpu.MemorySpace.SMEM),      # cbw scalar
            pl.BlockSpec((1, rh_p, rw_p), lambda b: (b, 0, 0)),
            pl.BlockSpec((h2, rh_p), lambda b: (0, 0)),
            pl.BlockSpec((rw_p, w2), lambda b: (0, 0)),
            pl.BlockSpec((1, h2, w2), lambda b: (b, 0, 0)),
            pl.BlockSpec((h2, 1), lambda b: (0, 0)),
            pl.BlockSpec((1, w2), lambda b: (0, 0)),
        ],
        out_specs=pl.BlockSpec((1, h2, w2), lambda b: (b, 0, 0)),
        out_shape=jax.ShapeDtypeStruct((B, h2, w2), jnp.float32),
        compiler_params=pltpu.CompilerParams(
            dimension_semantics=("parallel",),
            vmem_limit_bytes=28 * 1024 * 1024),
    )(cbw, readout_pad, GH_r, GWt_r, cb_ds, lch, lcw)


# ------------------------------------------------------------------
# Parameter init (deterministic, synthetic)
# ------------------------------------------------------------------
def _linear_init(key, cin, cout, scale=0.2):
    kw, kb = jax.random.split(key)
    w = scale * jax.random.normal(kw, (cin, cout), dtype=jnp.float32)
    b = 0.05 * jax.random.normal(kb, (cout,), dtype=jnp.float32)
    return w, b


def init_params(key, n_fix=4):
    keys = jax.random.split(key, 10)
    p = {}
    p["feat1"] = _linear_init(keys[0], 3, 8)
    p["feat2"] = _linear_init(keys[1], 3, 8)
    p["sal"] = [_linear_init(keys[2], 16, 16),
                _linear_init(keys[3], 16, 8),
                _linear_init(keys[4], 8, 1)]
    p["scan"] = [_linear_init(keys[5], 3 * n_fix, 16)]
    p["fixsel"] = [_linear_init(keys[6], 1 + 16, 16),
                   _linear_init(keys[7], 16, 1)]
    p["center_bias_weight"] = jnp.ones((1, 1), dtype=jnp.float32)
    p["sigma"] = 8.0
    return p


# ------------------------------------------------------------------
# DeepGazeIII forward
# ------------------------------------------------------------------
def deepgaze3_forward(params, x, centerbias, x_hist, y_hist,
                      downsample=2, readout_factor=2, saliency_map_factor=2):
    B, C, H, W = x.shape
    F = x_hist.shape[1]
    H1, W1 = int(H / downsample), int(W / downsample)
    rh = math.ceil(H / downsample / readout_factor)
    rw = math.ceil(W / downsample / readout_factor)
    P = rh * rw

    # ---- composed nearest-neighbour index maps (resize commutes with 1x1 convs) ----
    idx_h1, idx_w1 = _nearest_idx(H1, H), _nearest_idx(W1, W)
    # branch 1: x -> xs -> readout resolution
    b1_h = idx_h1[_nearest_idx(rh, H1)]
    b1_w = idx_w1[_nearest_idx(rw, W1)]
    # branch 2 ("deeper scale"): x -> xs -> xs/2 -> readout resolution
    b2_h = idx_h1[_nearest_idx(H1 // 2, H1)[_nearest_idx(rh, H1 // 2)]]
    b2_w = idx_w1[_nearest_idx(W1 // 2, W1)[_nearest_idx(rw, W1 // 2)]]

    # stacked (B, 6, P) branch inputs, bf16 in HBM (strided-slice sampling)
    x_b1 = take_hw(x, b1_h, b1_w)
    x_b2 = take_hw(x, b2_h, b2_w)
    x6 = jnp.concatenate([x_b1, x_b2], axis=1).reshape(B, 2 * C, P)

    TP = _choose_tp(P)
    P_pad = _round_up(P, TP)
    if P_pad != P:
        x6 = jnp.pad(x6, ((0, 0), (0, 0), (0, P_pad - P)))
    x6 = x6.astype(jnp.bfloat16)

    # fixation history for in-kernel scanpath features
    hist = jnp.concatenate([x_hist, y_hist], axis=1).astype(jnp.float32)
    hist = hist.reshape(B, 2 * F, 1)

    # ---- fused readout stack (one Pallas kernel, pixels on lanes) ----
    slab, offsets = build_readout_slab(params, F)
    readout_flat = fused_readout(hist, x6, slab, offsets,
                                 F=F, TP=TP, rh=rh, rw=rw, H=H, W=W)  # (B,1,P_pad)
    readout = readout_flat[:, 0, :P].reshape(B, rh, rw)

    # ---- Finalizer ----
    Hc, Wc = centerbias.shape[1], centerbias.shape[2]
    h2, w2 = int(Hc / saliency_map_factor), int(Wc / saliency_map_factor)
    cb_ds = nearest_resize(centerbias, h2, w2)                        # (B, h2, w2)

    rh_p, rw_p = _round_up(rh, 8), _round_up(rw, 128)
    readout_pad = jnp.pad(readout, ((0, 0), (0, rh_p - rh), (0, rw_p - rw)))
    GH_r, GWt_r = _blur_resize_mats(rh, rw, rh_p, rw_p, h2, w2, float(params["sigma"]))

    # nearest-upsample replication counts -> exact full-resolution logsumexp on the
    # downsampled map (no full-resolution normalization pass needed).
    lch = jnp.asarray(_upsample_log_counts(Hc, h2)).reshape(h2, 1)
    lcw = jnp.asarray(_upsample_log_counts(Wc, w2)).reshape(1, w2)
    cbw = params["center_bias_weight"].reshape(-1)                    # (1,) scalar (SMEM)

    out_ds = finalize(readout_pad, cb_ds, GH_r, GWt_r, cbw, lch, lcw)  # (B, h2, w2)
    out = nearest_resize(out_ds, Hc, Wc)   # integer factor -> broadcast, already normalized
    return out


# ------------------------------------------------------------------
if __name__ == "__main__":
    B, H, W = 2, 16, 16
    n_fix = 4

    key = jax.random.PRNGKey(0)
    kp, kx, kc, kxh, kyh = jax.random.split(key, 5)

    params = init_params(kp, n_fix=n_fix)

    x = jax.random.uniform(kx, (B, 3, H, W), dtype=jnp.float32)
    centerbias = 0.1 * jax.random.normal(kc, (B, H, W), dtype=jnp.float32)
    x_hist = jax.random.uniform(kxh, (B, n_fix), dtype=jnp.float32) * (W - 1)
    y_hist = jax.random.uniform(kyh, (B, n_fix), dtype=jnp.float32) * (H - 1)

    out = deepgaze3_forward(params, x, centerbias, x_hist, y_hist)
    out = jax.block_until_ready(out)

    assert out.shape == (B, H, W)
    # log-density property: exp(out) sums to 1 over the spatial dims
    sums = jnp.exp(out).sum(axis=(1, 2))
    assert bool(jnp.all(jnp.abs(sums - 1.0) < 1e-3))

    print("KERNEL_OK")
</pallas_src>

<mosaic_0001>
module attributes {stable_mosaic.version = 11 : i64} {
  func.func @kernel(%arg0: i32, %arg1: i32, %arg2: memref<1x8x1xf32, #tpu.memory_space<vmem>>, %arg3: memref<1x6x128xbf16, #tpu.memory_space<vmem>>, %arg4: memref<152x17xf32, #tpu.memory_space<vmem>>, %arg5: memref<1x1x128xf32, #tpu.memory_space<vmem>>) attributes {dimension_semantics = [#tpu.dimension_semantics<parallel>, #tpu.dimension_semantics<parallel>], iteration_bounds = array<i64: 2, 1>, scalar_prefetch = 0 : i64, scratch_operands = 0 : i64, tpu.core_type = #tpu.core_type<tc>, window_params = [{transform_indices = @transform_0, window_bounds = array<i64: 1, 8, 1>}, {transform_indices = @transform_1, window_bounds = array<i64: 1, 6, 128>}, {pipeline_mode = #tpu.pipeline_mode<synchronous>, transform_indices = @transform_2, window_bounds = array<i64: 152, 17>}, {transform_indices = @transform_3, window_bounds = array<i64: 1, 1, 128>}]} {
    %c0 = arith.constant 0 : index
    %c0_0 = arith.constant 0 : index
    %c0_1 = arith.constant 0 : index
    %0 = vector.load %arg3[%c0, %c0_0, %c0_1] : memref<1x6x128xbf16, #tpu.memory_space<vmem>>, vector<1x6x128xbf16>
    %1 = vector.shape_cast %0 : vector<1x6x128xbf16> to vector<6x128xbf16>
    %c0_2 = arith.constant 0 : index
    %c0_3 = arith.constant 0 : index
    %c0_4 = arith.constant 0 : index
    %2 = vector.load %arg2[%c0_2, %c0_3, %c0_4] : memref<1x8x1xf32, #tpu.memory_space<vmem>>, vector<1x8x1xf32>
    %3 = vector.shape_cast %2 : vector<1x8x1xf32> to vector<8x1xf32>
    %c0_5 = arith.constant 0 : index
    %c0_6 = arith.constant 0 : index
    %4 = vector.load %arg4[%c0_5, %c0_6] : memref<152x17xf32, #tpu.memory_space<vmem>>, vector<8x6xf32>
    %5 = arith.truncf %4 : vector<8x6xf32> to vector<8x6xbf16>
    %cst = arith.constant dense<0.000000e+00> : vector<8x128xf32>
    %6 = tpu.matmul %5, %1, %cst {dimension_numbers = #tpu.dot_dimension_numbers<[1], [0], [0], [1], [0, 0, 1, 1], [], []>} : vector<8x6xbf16>, vector<6x128xbf16>, vector<8x128xf32> -> vector<8x128xf32>
    %c0_7 = arith.constant 0 : index
    %c6 = arith.constant 6 : index
    %7 = vector.load %arg4[%c0_7, %c6] : memref<152x17xf32, #tpu.memory_space<vmem>>, vector<8x1xf32>
    %8 = vector.broadcast %7 : vector<8x1xf32> to vector<8x128xf32>
    %9 = arith.addf %6, %8 : vector<8x128xf32>
    %cst_8 = arith.constant 0.000000e+00 : f32
    %10 = vector.broadcast %cst_8 : f32 to vector<8x128xf32>
    %11 = arith.maximumf %9, %10 : vector<8x128xf32>
    %c8 = arith.constant 8 : index
    %c0_9 = arith.constant 0 : index
    %12 = vector.load %arg4[%c8, %c0_9] : memref<152x17xf32, #tpu.memory_space<vmem>>, vector<8x6xf32>
    %13 = arith.truncf %12 : vector<8x6xf32> to vector<8x6xbf16>
    %cst_10 = arith.constant dense<0.000000e+00> : vector<8x128xf32>
    %14 = tpu.matmul %13, %1, %cst_10 {dimension_numbers = #tpu.dot_dimension_numbers<[1], [0], [0], [1], [0, 0, 1, 1], [], []>} : vector<8x6xbf16>, vector<6x128xbf16>, vector<8x128xf32> -> vector<8x128xf32>
    %c8_11 = arith.constant 8 : index
    %c6_12 = arith.constant 6 : index
    %15 = vector.load %arg4[%c8_11, %c6_12] : memref<152x17xf32, #tpu.memory_space<vmem>>, vector<8x1xf32>
    %16 = vector.broadcast %15 : vector<8x1xf32> to vector<8x128xf32>
    %17 = arith.addf %14, %16 : vector<8x128xf32>
    %cst_13 = arith.constant 0.000000e+00 : f32
    %18 = vector.broadcast %cst_13 : f32 to vector<8x128xf32>
    %19 = arith.maximumf %17, %18 : vector<8x128xf32>
    %c16 = arith.constant 16 : index
    %c0_14 = arith.constant 0 : index
    %20 = vector.load %arg4[%c16, %c0_14] : memref<152x17xf32, #tpu.memory_space<vmem>>, vector<16x8xf32>
    %cst_15 = arith.constant dense<0.000000e+00> : vector<16x128xf32>
    %21 = tpu.matmul %20, %11, %cst_15 {dimension_numbers = #tpu.dot_dimension_numbers<[1], [0], [0], [1], [0, 0, 1, 1], [], []>} : vector<16x8xf32>, vector<8x128xf32>, vector<16x128xf32> -> vector<16x128xf32>
    %c32 = arith.constant 32 : index
    %c0_16 = arith.constant 0 : index
    %22 = vector.load %arg4[%c32, %c0_16] : memref<152x17xf32, #tpu.memory_space<vmem>>, vector<16x8xf32>
    %cst_17 = arith.constant dense<0.000000e+00> : vector<16x128xf32>
    %23 = tpu.matmul %22, %19, %cst_17 {dimension_numbers = #tpu.dot_dimension_numbers<[1], [0], [0], [1], [0, 0, 1, 1], [], []>} : vector<16x8xf32>, vector<8x128xf32>, vector<16x128xf32> -> vector<16x128xf32>
    %24 = arith.addf %21, %23 : vector<16x128xf32>
    %c16_18 = arith.constant 16 : index
    %c8_19 = arith.constant 8 : index
    %25 = vector.load %arg4[%c16_18, %c8_19] : memref<152x17xf32, #tpu.memory_space<vmem>>, vector<16x1xf32>
    %26 = vector.broadcast %25 : vector<16x1xf32> to vector<16x128xf32>
    %27 = arith.addf %24, %26 : vector<16x128xf32>
    %cst_20 = arith.constant 2.000000e+01 : f32
    %28 = vector.broadcast %cst_20 : f32 to vector<16x128xf32>
    %29 = arith.cmpf ogt, %27, %28 : vector<16x128xf32>
    %cst_21 = arith.constant 2.000000e+01 : f32
    %30 = vector.broadcast %cst_21 : f32 to vector<16x128xf32>
    %31 = arith.minimumf %27, %30 : vector<16x128xf32>
    %32 = math.exp %31 : vector<16x128xf32>
    %33 = math.log1p %32 : vector<16x128xf32>
    %34 = arith.select %29, %27, %33 : vector<16x128xi1>, vector<16x128xf32>
    %c48 = arith.constant 48 : index
    %c0_22 = arith.constant 0 : index
    %35 = vector.load %arg4[%c48, %c0_22] : memref<152x17xf32, #tpu.memory_space<vmem>>, vector<8x16xf32>
    %cst_23 = arith.constant dense<0.000000e+00> : vector<8x128xf32>
    %36 = tpu.matmul %35, %34, %cst_23 {dimension_numbers = #tpu.dot_dimension_numbers<[1], [0], [0], [1], [0, 0, 1, 1], [], []>} : vector<8x16xf32>, vector<16x128xf32>, vector<8x128xf32> -> vector<8x128xf32>
    %c48_24 = arith.constant 48 : index
    %c16_25 = arith.constant 16 : index
    %37 = vector.load %arg4[%c48_24, %c16_25] : memref<152x17xf32, #tpu.memory_space<vmem>>, vector<8x1xf32>
    %38 = vector.broadcast %37 : vector<8x1xf32> to vector<8x128xf32>
    %39 = arith.addf %36, %38 : vector<8x128xf32>
    %cst_26 = arith.constant 2.000000e+01 : f32
    %40 = vector.broadcast %cst_26 : f32 to vector<8x128xf32>
    %41 = arith.cmpf ogt, %39, %40 : vector<8x128xf32>
    %cst_27 = arith.constant 2.000000e+01 : f32
    %42 = vector.broadcast %cst_27 : f32 to vector<8x128xf32>
    %43 = arith.minimumf %39, %42 : vector<8x128xf32>
    %44 = math.exp %43 : vector<8x128xf32>
    %45 = math.log1p %44 : vector<8x128xf32>
    %46 = arith.select %41, %39, %45 : vector<8x128xi1>, vector<8x128xf32>
    %c56 = arith.constant 56 : index
    %c0_28 = arith.constant 0 : index
    %47 = vector.load %arg4[%c56, %c0_28] : memref<152x17xf32, #tpu.memory_space<vmem>>, vector<1x8xf32>
    %cst_29 = arith.constant dense<0.000000e+00> : vector<1x128xf32>
    %48 = tpu.matmul %47, %46, %cst_29 {dimension_numbers = #tpu.dot_dimension_numbers<[1], [0], [0], [1], [0, 0, 1, 1], [], []>} : vector<1x8xf32>, vector<8x128xf32>, vector<1x128xf32> -> vector<1x128xf32>
    %c56_30 = arith.constant 56 : index
    %c8_31 = arith.constant 8 : index
    %49 = vector.load %arg4[%c56_30, %c8_31] : memref<152x17xf32, #tpu.memory_space<vmem>>, vector<1x1xf32>
    %50 = vector.broadcast %49 : vector<1x1xf32> to vector<1x128xf32>
    %51 = arith.addf %48, %50 : vector<1x128xf32>
    %cst_32 = arith.constant 2.000000e+01 : f32
    %52 = vector.broadcast %cst_32 : f32 to vector<1x128xf32>
    %53 = arith.cmpf ogt, %51, %52 : vector<1x128xf32>
    %cst_33 = arith.constant 2.000000e+01 : f32
    %54 = vector.broadcast %cst_33 : f32 to vector<1x128xf32>
    %55 = arith.minimumf %51, %54 : vector<1x128xf32>
    %56 = math.exp %55 : vector<1x128xf32>
    %57 = math.log1p %56 : vector<1x128xf32>
    %58 = arith.select %53, %51, %57 : vector<1x128xi1>, vector<1x128xf32>
    %c128_i32 = arith.constant 128 : i32
    %59 = arith.muli %arg1, %c128_i32 : i32
    %60 = tpu.iota {dimensions = array<i32: 1>} : vector<1x128xi32>
    %61 = vector.broadcast %59 : i32 to vector<1x128xi32>
    %62 = arith.addi %61, %60 : vector<1x128xi32>
    %63 = arith.sitofp %62 : vector<1x128xi32> to vector<1x128xf32>
    %cst_34 = arith.constant 5.000000e-01 : f32
    %64 = vector.broadcast %cst_34 : f32 to vector<1x128xf32>
    %65 = arith.addf %63, %64 : vector<1x128xf32>
    %cst_35 = arith.constant 2.500000e-01 : f32
    %66 = vector.broadcast %cst_35 : f32 to vector<1x128xf32>
    %67 = arith.mulf %65, %66 : vector<1x128xf32>
    %68 = math.floor %67 : vector<1x128xf32>
    %69 = arith.fptosi %68 : vector<1x128xf32> to vector<1x128xi32>
    %c1_i32 = arith.constant 1 : i32
    %70 = vector.broadcast %c1_i32 : i32 to vector<1x128xi32>
    %c0_i32 = arith.constant 0 : i32
    %71 = vector.broadcast %c0_i32 : i32 to vector<1x128xi32>
    %c4_i32 = arith.constant 4 : i32
    %72 = vector.broadcast %c4_i32 : i32 to vector<1x128xi32>
    %73 = arith.muli %69, %72 : vector<1x128xi32>
    %74 = arith.cmpi sgt, %73, %62 : vector<1x128xi32>
    %75 = arith.select %74, %70, %71 : vector<1x128xi1>, vector<1x128xi32>
    %76 = arith.subi %69, %75 : vector<1x128xi32>
    %c1_i32_36 = arith.constant 1 : i32
    %77 = vector.broadcast %c1_i32_36 : i32 to vector<1x128xi32>
    %78 = arith.addi %76, %77 : vector<1x128xi32>
    %c4_i32_37 = arith.constant 4 : i32
    %79 = vector.broadcast %c4_i32_37 : i32 to vector<1x128xi32>
    %80 = arith.muli %78, %79 : vector<1x128xi32>
    %81 = arith.cmpi sle, %80, %62 : vector<1x128xi32>
    %82 = arith.select %81, %70, %71 : vector<1x128xi1>, vector<1x128xi32>
    %83 = arith.addi %76, %82 : vector<1x128xi32>
    %c4_i32_38 = arith.constant 4 : i32
    %84 = vector.broadcast %c4_i32_38 : i32 to vector<1x128xi32>
    %85 = arith.muli %83, %84 : vector<1x128xi32>
    %86 = arith.subi %62, %85 : vector<1x128xi32>
    %c4_i32_39 = arith.constant 4 : i32
    %87 = vector.broadcast %c4_i32_39 : i32 to vector<1x128xi32>
    %88 = arith.muli %83, %87 : vector<1x128xi32>
    %89 = arith.sitofp %88 : vector<1x128xi32> to vector<1x128xf32>
    %c4_i32_40 = arith.constant 4 : i32
    %90 = vector.broadcast %c4_i32_40 : i32 to vector<1x128xi32>
    %91 = arith.muli %86, %90 : vector<1x128xi32>
    %92 = arith.sitofp %91 : vector<1x128xi32> to vector<1x128xf32>
    %93 = vector.extract_strided_slice %3 {offsets = [0, 0], sizes = [4, 1], strides = [1, 1]} : vector<8x1xf32> to vector<4x1xf32>
    %94 = vector.extract_strided_slice %3 {offsets = [4, 0], sizes = [4, 1], strides = [1, 1]} : vector<8x1xf32> to vector<4x1xf32>
    %95 = vector.broadcast %92 : vector<1x128xf32> to vector<4x128xf32>
    %96 = vector.broadcast %93 : vector<4x1xf32> to vector<4x128xf32>
    %97 = arith.subf %95, %96 : vector<4x128xf32>
    %98 = vector.broadcast %89 : vector<1x128xf32> to vector<4x128xf32>
    %99 = vector.broadcast %94 : vector<4x1xf32> to vector<4x128xf32>
    %100 = arith.subf %98, %99 : vector<4x128xf32>
    %101 = arith.mulf %97, %97 : vector<4x128xf32>
    %102 = arith.mulf %100, %100 : vector<4x128xf32>
    %103 = arith.addf %101, %102 : vector<4x128xf32>
    %104 = math.sqrt %103 : vector<4x128xf32>
    %c64 = arith.constant 64 : index
    %c0_41 = arith.constant 0 : index
    %105 = vector.load %arg4[%c64, %c0_41] : memref<152x17xf32, #tpu.memory_space<vmem>>, vector<16x4xf32>
    %cst_42 = arith.constant dense<0.000000e+00> : vector<16x128xf32>
    %106 = tpu.matmul %105, %97, %cst_42 {dimension_numbers = #tpu.dot_dimension_numbers<[1], [0], [0], [1], [0, 0, 1, 1], [], []>} : vector<16x4xf32>, vector<4x128xf32>, vector<16x128xf32> -> vector<16x128xf32>
    %c80 = arith.constant 80 : index
    %c0_43 = arith.constant 0 : index
    %107 = vector.load %arg4[%c80, %c0_43] : memref<152x17xf32, #tpu.memory_space<vmem>>, vector<16x4xf32>
    %cst_44 = arith.constant dense<0.000000e+00> : vector<16x128xf32>
    %108 = tpu.matmul %107, %100, %cst_44 {dimension_numbers = #tpu.dot_dimension_numbers<[1], [0], [0], [1], [0, 0, 1, 1], [], []>} : vector<16x4xf32>, vector<4x128xf32>, vector<16x128xf32> -> vector<16x128xf32>
    %109 = arith.addf %106, %108 : vector<16x128xf32>
    %c96 = arith.constant 96 : index
    %c0_45 = arith.constant 0 : index
    %110 = vector.load %arg4[%c96, %c0_45] : memref<152x17xf32, #tpu.memory_space<vmem>>, vector<16x4xf32>
    %cst_46 = arith.constant dense<0.000000e+00> : vector<16x128xf32>
    %111 = tpu.matmul %110, %104, %cst_46 {dimension_numbers = #tpu.dot_dimension_numbers<[1], [0], [0], [1], [0, 0, 1, 1], [], []>} : vector<16x4xf32>, vector<4x128xf32>, vector<16x128xf32> -> vector<16x128xf32>
    %112 = arith.addf %109, %111 : vector<16x128xf32>
    %c64_47 = arith.constant 64 : index
    %c4 = arith.constant 4 : index
    %113 = vector.load %arg4[%c64_47, %c4] : memref<152x17xf32, #tpu.memory_space<vmem>>, vector<16x1xf32>
    %114 = vector.broadcast %113 : vector<16x1xf32> to vector<16x128xf32>
    %115 = arith.addf %112, %114 : vector<16x128xf32>
    %cst_48 = arith.constant 2.000000e+01 : f32
    %116 = vector.broadcast %cst_48 : f32 to vector<16x128xf32>
    %117 = arith.cmpf ogt, %115, %116 : vector<16x128xf32>
    %cst_49 = arith.constant 2.000000e+01 : f32
    %118 = vector.broadcast %cst_49 : f32 to vector<16x128xf32>
    %119 = arith.minimumf %115, %118 : vector<16x128xf32>
    %120 = math.exp %119 : vector<16x128xf32>
    %121 = math.log1p %120 : vector<16x128xf32>
    %122 = arith.select %117, %115, %121 : vector<16x128xi1>, vector<16x128xf32>
    %c112 = arith.constant 112 : index
    %c0_50 = arith.constant 0 : index
    %123 = vector.load %arg4[%c112, %c0_50] : memref<152x17xf32, #tpu.memory_space<vmem>>, vector<16x1xf32>
    %124 = vector.broadcast %123 : vector<16x1xf32> to vector<16x128xf32>
    %125 = vector.broadcast %58 : vector<1x128xf32> to vector<16x128xf32>
    %126 = arith.mulf %124, %125 : vector<16x128xf32>
    %c128 = arith.constant 128 : index
    %c0_51 = arith.constant 0 : index
    %127 = vector.load %arg4[%c128, %c0_51] : memref<152x17xf32, #tpu.memory_space<vmem>>, vector<16x16xf32>
    %cst_52 = arith.constant dense<0.000000e+00> : vector<16x128xf32>
    %128 = tpu.matmul %127, %122, %cst_52 {dimension_numbers = #tpu.dot_dimension_numbers<[1], [0], [0], [1], [0, 0, 1, 1], [], []>} : vector<16x16xf32>, vector<16x128xf32>, vector<16x128xf32> -> vector<16x128xf32>
    %129 = arith.addf %126, %128 : vector<16x128xf32>
    %c112_53 = arith.constant 112 : index
    %c1 = arith.constant 1 : index
    %130 = vector.load %arg4[%c112_53, %c1] : memref<152x17xf32, #tpu.memory_space<vmem>>, vector<16x1xf32>
    %131 = vector.broadcast %130 : vector<16x1xf32> to vector<16x128xf32>
    %132 = arith.addf %129, %131 : vector<16x128xf32>
    %cst_54 = arith.constant 2.000000e+01 : f32
    %133 = vector.broadcast %cst_54 : f32 to vector<16x128xf32>
    %134 = arith.cmpf ogt, %132, %133 : vector<16x128xf32>
    %cst_55 = arith.constant 2.000000e+01 : f32
    %135 = vector.broadcast %cst_55 : f32 to vector<16x128xf32>
    %136 = arith.minimumf %132, %135 : vector<16x128xf32>
    %137 = math.exp %136 : vector<16x128xf32>
    %138 = math.log1p %137 : vector<16x128xf32>
    %139 = arith.select %134, %132, %138 : vector<16x128xi1>, vector<16x128xf32>
    %c144 = arith.constant 144 : index
    %c0_56 = arith.constant 0 : index
    %140 = vector.load %arg4[%c144, %c0_56] : memref<152x17xf32, #tpu.memory_space<vmem>>, vector<1x16xf32>
    %cst_57 = arith.constant dense<0.000000e+00> : vector<1x128xf32>
    %141 = tpu.matmul %140, %139, %cst_57 {dimension_numbers = #tpu.dot_dimension_numbers<[1], [0], [0], [1], [0, 0, 1, 1], [], []>} : vector<1x16xf32>, vector<16x128xf32>, vector<1x128xf32> -> vector<1x128xf32>
    %c144_58 = arith.constant 144 : index
    %c16_59 = arith.constant 16 : index
    %142 = vector.load %arg4[%c144_58, %c16_59] : memref<152x17xf32, #tpu.memory_space<vmem>>, vector<1x1xf32>
    %143 = vector.broadcast %142 : vector<1x1xf32> to vector<1x128xf32>
    %144 = arith.addf %141, %143 : vector<1x128xf32>
    %c0_60 = arith.constant 0 : index
    %c0_61 = arith.constant 0 : index
    %c0_62 = arith.constant 0 : index
    %145 = vector.load %arg5[%c0_60, %c0_61, %c0_62] : memref<1x1x128xf32, #tpu.memory_space<vmem>>, vector<1x1x128xf32>
    %146 = vector.shape_cast %145 : vector<1x1x128xf32> to vector<1x128xf32>
    %147 = vector.shape_cast %144 : vector<1x128xf32> to vector<1x1x128xf32>
    tpu.vector_store %arg5[%c0_60, %c0_61, %c0_62], %147 {strides = array<i32>} : memref<1x1x128xf32, #tpu.memory_space<vmem>>, vector<1x1x128xf32>,
    return
  }
  func.func @transform_0(%arg0: i32, %arg1: i32) -> (i32, i32, i32) {
    %c0_i32 = arith.constant 0 : i32
    %c0_i32_0 = arith.constant 0 : i32
    %c0_i32_1 = arith.constant 0 : i32
    return %arg0, %c0_i32, %c0_i32_0 : i32, i32, i32
  }
  func.func @transform_1(%arg0: i32, %arg1: i32) -> (i32, i32, i32) {
    %c0_i32 = arith.constant 0 : i32
    %c0_i32_0 = arith.constant 0 : i32
    return %arg0, %c0_i32, %arg1 : i32, i32, i32
  }
  func.func @transform_2(%arg0: i32, %arg1: i32) -> (i32, i32) {
    %c0_i32 = arith.constant 0 : i32
    %c0_i32_0 = arith.constant 0 : i32
    %c0_i32_1 = arith.constant 0 : i32
    return %c0_i32, %c0_i32_0 : i32, i32
  }
  func.func @transform_3(%arg0: i32, %arg1: i32) -> (i32, i32, i32) {
    %c0_i32 = arith.constant 0 : i32
    %c0_i32_0 = arith.constant 0 : i32
    return %arg0, %c0_i32, %arg1 : i32, i32, i32
  }
}

</mosaic_0001>

<llo_original>
// kernel: tpu_custom_call.1
$region0: #{tpu_custom_call.1}
  #allocation0 [shape = 'u32[]', space=smem, size = 0x4, offset = 0x4, fixed_abs, tag = 'smem constant byte address 0x4 - core index']
  #allocation1 [shape = 'u32[144,128]{1,0:T(1,128)}', space=vmem, size = 0x12000, scoped, tag = 'internal scratch']
  %s0 = inlined_call_operand.vmem [shape: f32[2,8,1], index: 0, kind: input, shape index: {}]
  %s1 = inlined_call_operand.vmem [shape: bf16[2,6,128], index: 1, kind: input, shape index: {}]
  %s2 = inlined_call_operand.vmem [shape: f32[152,17], index: 2, kind: input, shape index: {}]
  %s3 = inlined_call_operand.hbm [shape: f32[2,1,128], index: 3, kind: output, shape index: {}]
  %s4 = sld [smem:[#allocation0]]
  $region45: #{tpu_custom_call.1} parent=0
    _
  %s6 = ssub.s32 1, %s4
  %s7 = scalar_select 0, %s6, %s4
  $region1: #{tpu_custom_call.1} parent=0
    #allocation2 [shape = 'u8[1024]{0}', space=vmem, size = 0x400, scoped, tag = 'output window, operand 0']
    #allocation3 [shape = 's32[2]{0}', space=sflag, size = 0x8, scoped, tag = 'scoped memory for tpu_custom_call.1']
    %8 = vsyncpa [#allocation3], 0
    %s9 = scalar_lea.sflag [#allocation3], 1
    %10 = vsyncpa %s9, 0
    loop: start=0, step=1, limit=4
    $region2: #{tpu_custom_call.1} parent=1 // loop_pre_header
      _
    $region3: #{tpu_custom_call.1} parent=1 // loop_header
      %s12 = sphi 0, %s16
      %p13 = scmp.ge.s32.totalorder %s12, 4
      %s19 = sphi 0, %s31
      %s20 = sphi 0, %s27
      %s21 = sphi 0, %s19
      %s22 = sphi 0, %s20
      %s23 = sphi 0, %s21
      %s24 = sphi 0, %s22
      %s34 = sphi 0, %s36
      %s37 = sphi 0, %s34
      %s38 = sphi 0, %s37
      %s54 = sphi 0, %s38
      %s62 = sphi 0, %s64
      %s65 = sphi 0, %s62
      %s66 = sphi 0, %s65
      %s82 = sphi 0, %s66
      %s86 = sphi 0, %s86
      %s88 = sphi 0, %s86
      %s89 = sphi 0, %s88
      %s103 = sphi 0, %s89
      %s111 = sphi 0, %s113
      %s114 = sphi 0, %s111
      %s115 = sphi 0, %s114
      %s131 = sphi 0, %s115
    $region4: #{tpu_custom_call.1} parent=1 // loop_header_branch
      %15 = sbr.rel (%p13) target = $region8
    $region5: #{tpu_custom_call.1} parent=1 // loop_body
      %s17 = ssub.s32 %s12, 1
      %s18 = ssub.s32 %s12, 2
      %s25 = sadd.s32 1, %s20
      %p26 = scmp.ge.s32.totalorder %s25, 1
      %s27 = scalar_select %p26, 0, %s25
      %s28 = sadd.s32 1, %s19
      %s29 = scalar_select %p26, %s28, %s19
      %p30 = scmp.ge.s32.totalorder %s29, 2
      %s31 = scalar_select %p30, 0, %s29
      %s32 = ssub.s32 %s19, %s31
      %p33 = scmp.eq.s32.totalorder %s32, 0
      %s35 = sadd.s32 %s34, 1
      %s36 = scalar_select %p33, %s34, %s35
      %p39 = pneg %p33
      %p40 = scmp.eq.s32.totalorder %s12, 1
      %p41 = por %p39, %p40
      %p42 = scmp.ne.s32.totalorder %s34, %s37
      %p43 = scmp.eq.s32.totalorder %s12, 0
      %p44 = por %p42, %p43
      %p45 = scmp.ne.s32.totalorder %s34, %s37
      %p46 = scmp.eq.s32.totalorder %s17, 1
      %p47 = por %p45, %p46
      %p48 = scmp.ne.s32.totalorder %s37, %s38
      %p49 = scmp.eq.s32.totalorder %s17, 0
      %p50 = por %p48, %p49
      %p51 = scmp.ne.s32.totalorder %s37, %s38
      %p52 = scmp.eq.s32.totalorder %s18, 1
      %p53 = por %p51, %p52
      %p55 = scmp.ne.s32.totalorder %s38, %s54
      %p56 = scmp.eq.s32.totalorder %s18, 0
      %p57 = por %p55, %p56
      %s58 = ssub.s32 %s19, %s31
      %s59 = ssub.s32 %s20, %s27
      %s60 = sor.u32 %s58, %s59
      %p61 = scmp.eq.s32.totalorder %s60, 0
      %s63 = sadd.s32 %s62, 1
      %s64 = scalar_select %p61, %s62, %s63
      %p67 = pneg %p61
      %p68 = scmp.eq.s32.totalorder %s12, 1
      %p69 = por %p67, %p68
      %p70 = scmp.ne.s32.totalorder %s62, %s65
      %p71 = scmp.eq.s32.totalorder %s12, 0
      %p72 = por %p70, %p71
      %p73 = scmp.ne.s32.totalorder %s62, %s65
      %p74 = scmp.eq.s32.totalorder %s17, 1
      %p75 = por %p73, %p74
      %p76 = scmp.ne.s32.totalorder %s65, %s66
      %p77 = scmp.eq.s32.totalorder %s17, 0
      %p78 = por %p76, %p77
      %p79 = scmp.ne.s32.totalorder %s65, %s66
      %p80 = scmp.eq.s32.totalorder %s18, 1
      %p81 = por %p79, %p80
      %p83 = scmp.ne.s32.totalorder %s66, %s82
      %p84 = scmp.eq.s32.totalorder %s18, 0
      %p85 = por %p83, %p84
      %s87 = sadd.s32 %s86, 1
      %p90 = scmp.eq.s32.totalorder %s12, 1
      %p91 = scmp.ne.s32.totalorder %s86, %s88
      %p92 = scmp.eq.s32.totalorder %s12, 0
      %p93 = por %p91, %p92
      %p94 = scmp.ne.s32.totalorder %s86, %s88
      %p95 = scmp.eq.s32.totalorder %s17, 1
      %p96 = por %p94, %p95
      %p97 = scmp.ne.s32.totalorder %s88, %s89
      %p98 = scmp.eq.s32.totalorder %s17, 0
      %p99 = por %p97, %p98
      %p100 = scmp.ne.s32.totalorder %s88, %s89
      %p101 = scmp.eq.s32.totalorder %s18, 1
      %p102 = por %p100, %p101
      %p104 = scmp.ne.s32.totalorder %s89, %s103
      %p105 = scmp.eq.s32.totalorder %s18, 0
      %p106 = por %p104, %p105
      %s107 = ssub.s32 %s19, %s31
      %s108 = ssub.s32 %s20, %s27
      %s109 = sor.u32 %s107, %s108
      %p110 = scmp.eq.s32.totalorder %s109, 0
      %s112 = sadd.s32 %s111, 1
      %s113 = scalar_select %p110, %s111, %s112
      %p116 = pneg %p110
      %p117 = scmp.eq.s32.totalorder %s12, 1
      %p118 = por %p116, %p117
      %p119 = scmp.ne.s32.totalorder %s111, %s114
      %p120 = scmp.eq.s32.totalorder %s12, 0
      %p121 = por %p119, %p120
      %p122 = scmp.ne.s32.totalorder %s111, %s114
      %p123 = scmp.eq.s32.totalorder %s17, 1
      %p124 = por %p122, %p123
      %p125 = scmp.ne.s32.totalorder %s114, %s115
      %p126 = scmp.eq.s32.totalorder %s17, 0
      %p127 = por %p125, %p126
      %p128 = scmp.ne.s32.totalorder %s114, %s115
      %p129 = scmp.eq.s32.totalorder %s18, 1
      %p130 = por %p128, %p129
      %p132 = scmp.ne.s32.totalorder %s115, %s131
      %p133 = scmp.eq.s32.totalorder %s18, 0
      %p134 = por %p132, %p133
      %p135 = scmp.le.s32.totalorder 1, %s12
      %p136 = scmp.lt.s32.totalorder %s12, 3
      %p137 = pnand %p135, %p136
      %p138 = pneg %p137
      // Predicated region
      $region9: #{tpu_custom_call.1} parent=5 // pred_check
        _
      $region10: #{tpu_custom_call.1} parent=5 // pred_check_branch
        %140 = sbr.rel (%p137) target = $region12
      $region11: #{tpu_custom_call.1} parent=5 // pred_region
        %s141 = ssub.s32 %s12, 1
        // Predicated region
        $region13: #{tpu_custom_call.1} parent=11 // pred_check
          %p142 = pneg %p99
        $region14: #{tpu_custom_call.1} parent=11 // pred_check_branch
          %144 = sbr.rel (%p142) target = $region16
        $region15: #{tpu_custom_call.1} parent=11 // pred_region
          _
        $region16: #{tpu_custom_call.1} parent=11 // pred_fallthru
          _
      $region12: #{tpu_custom_call.1} parent=5 // pred_fallthru
        _
      %p145 = scmp.lt.s32.totalorder %s12, 2
      // Predicated region
      $region17: #{tpu_custom_call.1} parent=5 // pred_check
        %p146 = pneg %p145
      $region18: #{tpu_custom_call.1} parent=5 // pred_check_branch
        %148 = sbr.rel (%p146) target = $region20
      $region19: #{tpu_custom_call.1} parent=5 // pred_region
        // Predicated region
        $region21: #{tpu_custom_call.1} parent=19 // pred_check
          %p149 = pneg %p44
        $region22: #{tpu_custom_call.1} parent=19 // pred_check_branch
          %151 = sbr.rel (%p149) target = $region24
        $region23: #{tpu_custom_call.1} parent=19 // pred_region
          %p152 = scmp.lt.s32.totalorder %s19, 1
          %s153 = scalar_select %p152, %s19, 1
          %s154 = smul.addr %s153, 8
          %s155 = scalar_lea.vmem %s0, %s154
        $region24: #{tpu_custom_call.1} parent=19 // pred_fallthru
          _
        // Predicated region
        $region25: #{tpu_custom_call.1} parent=19 // pred_check
          %p156 = pneg %p72
        $region26: #{tpu_custom_call.1} parent=19 // pred_check_branch
          %158 = sbr.rel (%p156) target = $region28
        $region27: #{tpu_custom_call.1} parent=19 // pred_region
          %p159 = scmp.lt.s32.totalorder %s19, 1
          %s160 = scalar_select %p159, %s19, 1
          %p161 = scmp.lt.s32.totalorder %s20, 0
          %s162 = scalar_select %p161, %s20, 0
          %s163 = sadd.s32 %s162, %s160
          %s164 = smul.addr %s163, 4
          %s165 = scalar_lea.vmem %s1, %s164
        $region28: #{tpu_custom_call.1} parent=19 // pred_fallthru
          _
      $region20: #{tpu_custom_call.1} parent=5 // pred_fallthru
        _
      %p166 = scmp.le.s32.totalorder 1, %s12
      %p167 = scmp.lt.s32.totalorder %s12, 3
      %p168 = pnand %p166, %p167
      %p169 = pneg %p168
      // Predicated region
      $region29: #{tpu_custom_call.1} parent=5 // pred_check
        _
      $region30: #{tpu_custom_call.1} parent=5 // pred_check_branch
        %171 = sbr.rel (%p168) target = $region32
      $region31: #{tpu_custom_call.1} parent=5 // pred_region
        %s172 = ssub.s32 %s12, 1
        %p173 = scmp.lt.s32.totalorder %s21, 1
        %s174 = scalar_select %p173, %s21, 1
        %s175 = smul.addr %s174, 8
        %s176 = scalar_lea.vmem %s0, %s175
        %p177 = pneg %p50
        %p178 = pneg %p47
        %p179 = scmp.lt.s32.totalorder %s21, 1
        %s180 = scalar_select %p179, %s21, 1
        %p181 = scmp.lt.s32.totalorder %s22, 0
        %s182 = scalar_select %p181, %s22, 0
        %s183 = sadd.s32 %s182, %s180
        %s184 = smul.addr %s183, 4
        %s185 = scalar_lea.vmem %s1, %s184
        %p186 = pneg %p78
        %p187 = pneg %p75
        %p188 = pneg %p99
        %p189 = pneg %p96
        %p190 = pneg %p127
        %p191 = pneg %p124
        %s192 = sand.u32 %s114, 1
        %s193 = scalar_lea.sflag [#allocation3], %s192
        %s194 = sand.u32 %s114, 1
        %s195 = scalar_lea.vmem [#allocation2], %s194
        %p196 = scmp.lt.s32.totalorder %s21, 1
        %s197 = scalar_select %p196, %s21, 1
        %s198 = smul.addr %s197, 8
        %s199 = scalar_lea.vmem %s0, %s198
        %p200 = scmp.lt.s32.totalorder %s21, 1
        %s201 = scalar_select %p200, %s21, 1
        %p202 = scmp.lt.s32.totalorder %s22, 0
        %s203 = scalar_select %p202, %s22, 0
        %s204 = sadd.s32 %s203, %s201
        %s205 = smul.addr %s204, 4
        %s206 = scalar_lea.vmem %s1, %s205
        %v208 = vld [vmem:[%s206] sm:$0x7]
        %v209 = vld [vmem:[%s199] sm:$0xff]
        %v210 = vld [vmem:[%s2] sm:$0xff]
        %v211 = vpack.c.bf16 %v210, %v210
        %213 = vset.pattern.permute.xlu0 6
        %214 = vperm.xlu0 %213, %v210
        %v215 = vpop.permute.xlu0 %214
        %vm217 = vcmask 48128
        %v219 = vsel %vm217, %v211, 0
        %vm221 = vcmask 1042432
        %v223 = vsel %vm221, %v208, 0
        %225 = vmatprep.subr.bf16.mxu0 0
        %226 = vmatpush1.bf16.msra.mxu0 %v223
        %227 = vmatprep.subr.bf16.mxu0 0
        %228 = vmatpush1.bf16.msra.mxu0 0
        %229 = vmatprep.subr.bf16.mxu0 0
        %230 = vmatpush1.bf16.msra.mxu0 0
        %231 = vmatprep.subr.bf16.mxu0 0
        %232 = vmatpush1.bf16.msra.mxu0 0
        %233 = vmatprep.subr.bf16.mxu0 0
        %234 = vmatpush1.bf16.msra.mxu0 0
        %235 = vmatprep.subr.bf16.mxu0 0
        %236 = vmatpush1.bf16.msra.mxu0 0
        %237 = vmatprep.subr.bf16.mxu0 0
        %238 = vmatpush1.bf16.msra.mxu0 0
        %239 = vmatprep.subr.bf16.mxu0 0
        %240 = vmatpush1.bf16.msra.mxu0 0
        %241 = vmatprep.subr.bf16.mxu0 0
        %242 = vmatpush1.bf16.msra.mxu0 0
        %243 = vmatprep.subr.bf16.mxu0 0
        %244 = vmatpush1.bf16.msra.mxu0 0
        %245 = vmatprep.subr.bf16.mxu0 0
        %246 = vmatpush1.bf16.msra.mxu0 0
        %247 = vmatprep.subr.bf16.mxu0 0
        %248 = vmatpush1.bf16.msra.mxu0 0
        %249 = vmatprep.subr.bf16.mxu0 0
        %250 = vmatpush1.bf16.msra.mxu0 0
        %251 = vmatprep.subr.bf16.mxu0 0
        %252 = vmatpush1.bf16.msra.mxu0 0
        %253 = vmatprep.subr.bf16.mxu0 0
        %254 = vmatpush1.bf16.msra.mxu0 0
        %255 = vmatprep.subr.bf16.mxu0 0
        %256 = vmatpush1.bf16.msra.mxu0 0
        %257 = vmatprep.mubr.bf16.mxu0 0
        %258 = vmatmul.mubr.bf16.gmra.mrb[0].mxu0 %v219
        %v259 = vpop.f32.mrb[0].mxu0
        %v260 = vadd.f32 %v215, %v259
        %v261 = vpop.f32.mrb[0].mxu0
        %v262 = vpop.f32.mrb[0].mxu0
        %v263 = vpop.f32.mrb[0].mxu0
        %264 = vdwg.mxu0
        %v265 = vmax.f32 %v260, 0.0
        %v266 = vld [vmem:[%s2 + $0x8] sm:$0xff]
        %v267 = vpack.c.bf16 %v266, %v266
        %269 = vset.pattern.permute.xlu0 6
        %270 = vperm.xlu0 %269, %v266
        %v271 = vpop.permute.xlu0 %270
        %v274 = vsel %vm217, %v267, 0
        %276 = vmatprep.subr.bf16.mxu0 0
        %277 = vmatpush1.bf16.msra.mxu0 %v223
        %278 = vmatprep.subr.bf16.mxu0 0
        %279 = vmatpush1.bf16.msra.mxu0 0
        %280 = vmatprep.subr.bf16.mxu0 0
        %281 = vmatpush1.bf16.msra.mxu0 0
        %282 = vmatprep.subr.bf16.mxu0 0
        %283 = vmatpush1.bf16.msra.mxu0 0
        %284 = vmatprep.subr.bf16.mxu0 0
        %285 = vmatpush1.bf16.msra.mxu0 0
        %286 = vmatprep.subr.bf16.mxu0 0
        %287 = vmatpush1.bf16.msra.mxu0 0
        %288 = vmatprep.subr.bf16.mxu0 0
        %289 = vmatpush1.bf16.msra.mxu0 0
        %290 = vmatprep.subr.bf16.mxu0 0
        %291 = vmatpush1.bf16.msra.mxu0 0
        %292 = vmatprep.subr.bf16.mxu0 0
        %293 = vmatpush1.bf16.msra.mxu0 0
        %294 = vmatprep.subr.bf16.mxu0 0
        %295 = vmatpush1.bf16.msra.mxu0 0
        %296 = vmatprep.subr.bf16.mxu0 0
        %297 = vmatpush1.bf16.msra.mxu0 0
        %298 = vmatprep.subr.bf16.mxu0 0
        %299 = vmatpush1.bf16.msra.mxu0 0
        %300 = vmatprep.subr.bf16.mxu0 0
        %301 = vmatpush1.bf16.msra.mxu0 0
        %302 = vmatprep.subr.bf16.mxu0 0
        %303 = vmatpush1.bf16.msra.mxu0 0
        %304 = vmatprep.subr.bf16.mxu0 0
        %305 = vmatpush1.bf16.msra.mxu0 0
        %306 = vmatprep.subr.bf16.mxu0 0
        %307 = vmatpush1.bf16.msra.mxu0 0
        %308 = vmatprep.mubr.bf16.mxu0 0
        %309 = vmatmul.mubr.bf16.gmra.mrb[0].mxu0 %v274
        %v310 = vpop.f32.mrb[0].mxu0
        %v311 = vadd.f32 %v271, %v310
        %v312 = vpop.f32.mrb[0].mxu0
        %v313 = vpop.f32.mrb[0].mxu0
        %v314 = vpop.f32.mrb[0].mxu0
        %315 = vdwg.mxu0
        %v316 = vmax.f32 %v311, 0.0
        %v317 = vld [vmem:[%s2 + $0x10] sm:$0xff]
        %v318 = vld [vmem:[%s2 + $0x18] sm:$0xff]
        %v319 = vld [vmem:[%s2 + $0x20] sm:$0xff]
        %v320 = vld [vmem:[%s2 + $0x28] sm:$0xff]
        %vm321 = vcmask 64512
        %v323 = vsel %vm321, %v319, 0
        %v326 = vsel %vm321, %v320, 0
        %328 = vmatprep.subr.mxu0 0.0
        %329 = vmatpush1.msra.mxu0 %v316
        %330 = vmatprep.subr.mxu0 0.0
        %331 = vmatpush1.msra.mxu0 0.0
        %332 = vmatprep.subr.mxu0 0.0
        %333 = vmatpush1.msra.mxu0 0.0
        %334 = vmatprep.subr.mxu0 0.0
        %335 = vmatpush1.msra.mxu0 0.0
        %336 = vmatprep.subr.mxu0 0.0
        %337 = vmatpush1.msra.mxu0 0.0
        %338 = vmatprep.subr.mxu0 0.0
        %339 = vmatpush1.msra.mxu0 0.0
        %340 = vmatprep.subr.mxu0 0.0
        %341 = vmatpush1.msra.mxu0 0.0
        %342 = vmatprep.subr.mxu0 0.0
        %343 = vmatpush1.msra.mxu0 0.0
        %344 = vmatprep.subr.mxu0 0.0
        %345 = vmatpush1.msra.mxu0 0.0
        %346 = vmatprep.subr.mxu0 0.0
        %347 = vmatpush1.msra.mxu0 0.0
        %348 = vmatprep.subr.mxu0 0.0
        %349 = vmatpush1.msra.mxu0 0.0
        %350 = vmatprep.subr.mxu0 0.0
        %351 = vmatpush1.msra.mxu0 0.0
        %352 = vmatprep.subr.mxu0 0.0
        %353 = vmatpush1.msra.mxu0 0.0
        %354 = vmatprep.subr.mxu0 0.0
        %355 = vmatpush1.msra.mxu0 0.0
        %356 = vmatprep.subr.mxu0 0.0
        %357 = vmatpush1.msra.mxu0 0.0
        %358 = vmatprep.subr.mxu0 0.0
        %359 = vmatpush1.msra.mxu0 0.0
        %360 = vmatprep.subr.mxu0 0.0
        %361 = vmatpush1.msra.mxu0 0.0
        %362 = vmatprep.subr.mxu0 0.0
        %363 = vmatpush1.msra.mxu0 0.0
        %364 = vmatprep.subr.mxu0 0.0
        %365 = vmatpush1.msra.mxu0 0.0
        %366 = vmatprep.subr.mxu0 0.0
        %367 = vmatpush1.msra.mxu0 0.0
        %368 = vmatprep.subr.mxu0 0.0
        %369 = vmatpush1.msra.mxu0 0.0
        %370 = vmatprep.subr.mxu0 0.0
        %371 = vmatpush1.msra.mxu0 0.0
        %372 = vmatprep.subr.mxu0 0.0
        %373 = vmatpush1.msra.mxu0 0.0
        %374 = vmatprep.subr.mxu0 0.0
        %375 = vmatpush1.msra.mxu0 0.0
        %376 = vmatprep.subr.mxu0 0.0
        %377 = vmatpush1.msra.mxu0 0.0
        %378 = vmatprep.subr.mxu0 0.0
        %379 = vmatpush1.msra.mxu0 0.0
        %380 = vmatprep.subr.mxu0 0.0
        %381 = vmatpush1.msra.mxu0 0.0
        %382 = vmatprep.subr.mxu0 0.0
        %383 = vmatpush1.msra.mxu0 0.0
        %384 = vmatprep.subr.mxu0 0.0
        %385 = vmatpush1.msra.mxu0 0.0
        %386 = vmatprep.subr.mxu0 0.0
        %387 = vmatpush1.msra.mxu0 0.0
        %388 = vmatprep.subr.mxu0 0.0
        %389 = vmatpush1.msra.mxu0 0.0
        %390 = vmatprep.subr.mxu0 0.0
        %391 = vmatpush1.msra.mxu0 0.0
        %392 = vmatprep.mubr.f32.mxu0 0.0
        %393 = vmatmul.mubr.f32.gmra.mrb[0].mxu0 %v323
        %v394 = vpop.f32.mrb[0].mxu0
        %v395 = vadd.f32 0.0, %v394
        %v396 = vpop.f32.mrb[0].mxu0
        %397 = vmatprep.mubr.f32.mxu0 0.0
        %398 = vmatmul.mubr.f32.gmra.mrb[0].mxu0 %v326
        %v399 = vpop.f32.mrb[0].mxu0
        %v400 = vadd.f32 0.0, %v399
        %v401 = vpop.f32.mrb[0].mxu0
        %402 = vdwg.mxu0
        %v404 = vsel %vm321, %v317, 0
        %v407 = vsel %vm321, %v318, 0
        %409 = vmatprep.subr.mxu0 0.0
        %410 = vmatpush1.msra.mxu0 %v265
        %411 = vmatprep.subr.mxu0 0.0
        %412 = vmatpush1.msra.mxu0 0.0
        %413 = vmatprep.subr.mxu0 0.0
        %414 = vmatpush1.msra.mxu0 0.0
        %415 = vmatprep.subr.mxu0 0.0
        %416 = vmatpush1.msra.mxu0 0.0
        %417 = vmatprep.subr.mxu0 0.0
        %418 = vmatpush1.msra.mxu0 0.0
        %419 = vmatprep.subr.mxu0 0.0
        %420 = vmatpush1.msra.mxu0 0.0
        %421 = vmatprep.subr.mxu0 0.0
        %422 = vmatpush1.msra.mxu0 0.0
        %423 = vmatprep.subr.mxu0 0.0
        %424 = vmatpush1.msra.mxu0 0.0
        %425 = vmatprep.subr.mxu0 0.0
        %426 = vmatpush1.msra.mxu0 0.0
        %427 = vmatprep.subr.mxu0 0.0
        %428 = vmatpush1.msra.mxu0 0.0
        %429 = vmatprep.subr.mxu0 0.0
        %430 = vmatpush1.msra.mxu0 0.0
        %431 = vmatprep.subr.mxu0 0.0
        %432 = vmatpush1.msra.mxu0 0.0
        %433 = vmatprep.subr.mxu0 0.0
        %434 = vmatpush1.msra.mxu0 0.0
        %435 = vmatprep.subr.mxu0 0.0
        %436 = vmatpush1.msra.mxu0 0.0
        %437 = vmatprep.subr.mxu0 0.0
        %438 = vmatpush1.msra.mxu0 0.0
        %439 = vmatprep.subr.mxu0 0.0
        %440 = vmatpush1.msra.mxu0 0.0
        %441 = vmatprep.subr.mxu0 0.0
        %442 = vmatpush1.msra.mxu0 0.0
        %443 = vmatprep.subr.mxu0 0.0
        %444 = vmatpush1.msra.mxu0 0.0
        %445 = vmatprep.subr.mxu0 0.0
        %446 = vmatpush1.msra.mxu0 0.0
        %447 = vmatprep.subr.mxu0 0.0
        %448 = vmatpush1.msra.mxu0 0.0
        %449 = vmatprep.subr.mxu0 0.0
        %450 = vmatpush1.msra.mxu0 0.0
        %451 = vmatprep.subr.mxu0 0.0
        %452 = vmatpush1.msra.mxu0 0.0
        %453 = vmatprep.subr.mxu0 0.0
        %454 = vmatpush1.msra.mxu0 0.0
        %455 = vmatprep.subr.mxu0 0.0
        %456 = vmatpush1.msra.mxu0 0.0
        %457 = vmatprep.subr.mxu0 0.0
        %458 = vmatpush1.msra.mxu0 0.0
        %459 = vmatprep.subr.mxu0 0.0
        %460 = vmatpush1.msra.mxu0 0.0
        %461 = vmatprep.subr.mxu0 0.0
        %462 = vmatpush1.msra.mxu0 0.0
        %463 = vmatprep.subr.mxu0 0.0
        %464 = vmatpush1.msra.mxu0 0.0
        %465 = vmatprep.subr.mxu0 0.0
        %466 = vmatpush1.msra.mxu0 0.0
        %467 = vmatprep.subr.mxu0 0.0
        %468 = vmatpush1.msra.mxu0 0.0
        %469 = vmatprep.subr.mxu0 0.0
        %470 = vmatpush1.msra.mxu0 0.0
        %471 = vmatprep.subr.mxu0 0.0
        %472 = vmatpush1.msra.mxu0 0.0
        %473 = vmatprep.mubr.f32.mxu0 0.0
        %474 = vmatmul.mubr.f32.gmra.mrb[0].mxu0 %v404
        %v475 = vpop.f32.mrb[0].mxu0
        %v476 = vadd.f32 %v395, %v475
        %v477 = vpop.f32.mrb[0].mxu0
        %478 = vmatprep.mubr.f32.mxu0 0.0
        %479 = vmatmul.mubr.f32.gmra.mrb[0].mxu0 %v407
        %v480 = vpop.f32.mrb[0].mxu0
        %v481 = vadd.f32 %v400, %v480
        %v482 = vpop.f32.mrb[0].mxu0
        %483 = vdwg.mxu0
        %484 = vset.pattern.permute.xlu0 8
        %485 = vperm.xlu0 %484, %v317
        %v486 = vpop.permute.xlu0 %485
        %488 = vset.pattern.permute.xlu0 8
        %489 = vperm.xlu0 %488, %v318
        %v490 = vpop.permute.xlu0 %489
        %v492 = vadd.f32 %v476, %v486
        %v493 = vadd.f32 %v481, %v490
        %vm494 = vcmp.gt.f32.partialorder %v492, 20.0
        %vm495 = vcmp.gt.f32.partialorder %v493, 20.0
        %v496 = vmin.f32 %v492, 20.0
        %v497 = vmin.f32 %v493, 20.0
        %v498 = vmul.f32 %v496, 1.442695
        %v499 = vpow.pop %v498
        %v500 = vmul.f32 %v497, 1.442695
        %v501 = vpow.pop %v500
        %v502 = vadd.f32 %v499, 1.0
        %v503 = vlog2.pop %v502
        %v504 = vmul.f32 %v503, 0.6931472
        %v505 = vmul.f32 -0.5, %v499
        %v506 = vadd.f32 %v505, 1.0
        %v507 = vmul.f32 %v506, %v499
        %v508 = vand.u32 2147483647, %v499
        %vm509 = vcmp.lt.f32.partialorder %v508, 0.0004427343
        %v510 = vsel %vm509, %v507, %v504
        %v511 = vadd.f32 %v501, 1.0
        %v512 = vlog2.pop %v511
        %v513 = vmul.f32 %v512, 0.6931472
        %v514 = vmul.f32 -0.5, %v501
        %v515 = vadd.f32 %v514, 1.0
        %v516 = vmul.f32 %v515, %v501
        %v517 = vand.u32 2147483647, %v501
        %vm518 = vcmp.lt.f32.partialorder %v517, 0.0004427343
        %v519 = vsel %vm518, %v516, %v513
        %v520 = vsel %vm494, %v492, %v510
        %v521 = vsel %vm495, %v493, %v519
        %v522 = vld [vmem:[%s2 + $0x30] sm:$0xff]
        %524 = vset.pattern.permute.xlu0 16
        %525 = vperm.xlu0 %524, %v522
        %v526 = vpop.permute.xlu0 %525
        %vm528 = vcmask 130048
        %v529 = vsel %vm528, %v522, 0
        %531 = vmatprep.subr.mxu0 0.0
        %532 = vmatpush1.msra.mxu0 %v520
        %533 = vmatprep.subr.mxu0 0.0
        %534 = vmatpush1.msra.mxu0 %v521
        %535 = vmatprep.subr.mxu0 0.0
        %536 = vmatpush1.msra.mxu0 0.0
        %537 = vmatprep.subr.mxu0 0.0
        %538 = vmatpush1.msra.mxu0 0.0
        %539 = vmatprep.subr.mxu0 0.0
        %540 = vmatpush1.msra.mxu0 0.0
        %541 = vmatprep.subr.mxu0 0.0
        %542 = vmatpush1.msra.mxu0 0.0
        %543 = vmatprep.subr.mxu0 0.0
        %544 = vmatpush1.msra.mxu0 0.0
        %545 = vmatprep.subr.mxu0 0.0
        %546 = vmatpush1.msra.mxu0 0.0
        %547 = vmatprep.subr.mxu0 0.0
        %548 = vmatpush1.msra.mxu0 0.0
        %549 = vmatprep.subr.mxu0 0.0
        %550 = vmatpush1.msra.mxu0 0.0
        %551 = vmatprep.subr.mxu0 0.0
        %552 = vmatpush1.msra.mxu0 0.0
        %553 = vmatprep.subr.mxu0 0.0
        %554 = vmatpush1.msra.mxu0 0.0
        %555 = vmatprep.subr.mxu0 0.0
        %556 = vmatpush1.msra.mxu0 0.0
        %557 = vmatprep.subr.mxu0 0.0
        %558 = vmatpush1.msra.mxu0 0.0
        %559 = vmatprep.subr.mxu0 0.0
        %560 = vmatpush1.msra.mxu0 0.0
        %561 = vmatprep.subr.mxu0 0.0
        %562 = vmatpush1.msra.mxu0 0.0
        %563 = vmatprep.subr.mxu0 0.0
        %564 = vmatpush1.msra.mxu0 0.0
        %565 = vmatprep.subr.mxu0 0.0
        %566 = vmatpush1.msra.mxu0 0.0
        %567 = vmatprep.subr.mxu0 0.0
        %568 = vmatpush1.msra.mxu0 0.0
        %569 = vmatprep.subr.mxu0 0.0
        %570 = vmatpush1.msra.mxu0 0.0
        %571 = vmatprep.subr.mxu0 0.0
        %572 = vmatpush1.msra.mxu0 0.0
        %573 = vmatprep.subr.mxu0 0.0
        %574 = vmatpush1.msra.mxu0 0.0
        %575 = vmatprep.subr.mxu0 0.0
        %576 = vmatpush1.msra.mxu0 0.0
        %577 = vmatprep.subr.mxu0 0.0
        %578 = vmatpush1.msra.mxu0 0.0
        %579 = vmatprep.subr.mxu0 0.0
        %580 = vmatpush1.msra.mxu0 0.0
        %581 = vmatprep.subr.mxu0 0.0
        %582 = vmatpush1.msra.mxu0 0.0
        %583 = vmatprep.subr.mxu0 0.0
        %584 = vmatpush1.msra.mxu0 0.0
        %585 = vmatprep.subr.mxu0 0.0
        %586 = vmatpush1.msra.mxu0 0.0
        %587 = vmatprep.subr.mxu0 0.0
        %588 = vmatpush1.msra.mxu0 0.0
        %589 = vmatprep.subr.mxu0 0.0
        %590 = vmatpush1.msra.mxu0 0.0
        %591 = vmatprep.subr.mxu0 0.0
        %592 = vmatpush1.msra.mxu0 0.0
        %593 = vmatprep.subr.mxu0 0.0
        %594 = vmatpush1.msra.mxu0 0.0
        %595 = vmatprep.mubr.f32.mxu0 0.0
        %596 = vmatmul.mubr.f32.gmra.mrb[0].mxu0 %v529
        %v597 = vpop.f32.mrb[0].mxu0
        %v598 = vadd.f32 %v526, %v597
        %v599 = vpop.f32.mrb[0].mxu0
        %600 = vdwg.mxu0
        %vm601 = vcmp.gt.f32.partialorder %v598, 20.0
        %v602 = vmin.f32 %v598, 20.0
        %v603 = vmul.f32 %v602, 1.442695
        %v604 = vpow.pop %v603
        %v605 = vadd.f32 %v604, 1.0
        %v606 = vlog2.pop %v605
        %v607 = vmul.f32 %v606, 0.6931472
        %v608 = vmul.f32 -0.5, %v604
        %v609 = vadd.f32 %v608, 1.0
        %v610 = vmul.f32 %v609, %v604
        %v611 = vand.u32 2147483647, %v604
        %vm612 = vcmp.lt.f32.partialorder %v611, 0.0004427343
        %v613 = vsel %vm612, %v610, %v607
        %v614 = vsel %vm601, %v598, %v613
        %v615 = vld [vmem:[%s2 + $0x38] sm:$0x1]
        %617 = vset.pattern.permute.xlu0 8
        %618 = vperm.xlu0 %617, %v615
        %v619 = vpop.permute.xlu0 %618
        %v621 = vsel %vm321, %v615, 0
        %623 = vmatprep.subr.mxu0 0.0
        %624 = vmatpush1.msra.mxu0 %v614
        %625 = vmatprep.subr.mxu0 0.0
        %626 = vmatpush1.msra.mxu0 0.0
        %627 = vmatprep.subr.mxu0 0.0
        %628 = vmatpush1.msra.mxu0 0.0
        %629 = vmatprep.subr.mxu0 0.0
        %630 = vmatpush1.msra.mxu0 0.0
        %631 = vmatprep.subr.mxu0 0.0
        %632 = vmatpush1.msra.mxu0 0.0
        %633 = vmatprep.subr.mxu0 0.0
        %634 = vmatpush1.msra.mxu0 0.0
        %635 = vmatprep.subr.mxu0 0.0
        %636 = vmatpush1.msra.mxu0 0.0
        %637 = vmatprep.subr.mxu0 0.0
        %638 = vmatpush1.msra.mxu0 0.0
        %639 = vmatprep.subr.mxu0 0.0
        %640 = vmatpush1.msra.mxu0 0.0
        %641 = vmatprep.subr.mxu0 0.0
        %642 = vmatpush1.msra.mxu0 0.0
        %643 = vmatprep.subr.mxu0 0.0
        %644 = vmatpush1.msra.mxu0 0.0
        %645 = vmatprep.subr.mxu0 0.0
        %646 = vmatpush1.msra.mxu0 0.0
        %647 = vmatprep.subr.mxu0 0.0
        %648 = vmatpush1.msra.mxu0 0.0
        %649 = vmatprep.subr.mxu0 0.0
        %650 = vmatpush1.msra.mxu0 0.0
        %651 = vmatprep.subr.mxu0 0.0
        %652 = vmatpush1.msra.mxu0 0.0
        %653 = vmatprep.subr.mxu0 0.0
        %654 = vmatpush1.msra.mxu0 0.0
        %655 = vmatprep.subr.mxu0 0.0
        %656 = vmatpush1.msra.mxu0 0.0
        %657 = vmatprep.subr.mxu0 0.0
        %658 = vmatpush1.msra.mxu0 0.0
        %659 = vmatprep.subr.mxu0 0.0
        %660 = vmatpush1.msra.mxu0 0.0
        %661 = vmatprep.subr.mxu0 0.0
        %662 = vmatpush1.msra.mxu0 0.0
        %663 = vmatprep.subr.mxu0 0.0
        %664 = vmatpush1.msra.mxu0 0.0
        %665 = vmatprep.subr.mxu0 0.0
        %666 = vmatpush1.msra.mxu0 0.0
        %667 = vmatprep.subr.mxu0 0.0
        %668 = vmatpush1.msra.mxu0 0.0
        %669 = vmatprep.subr.mxu0 0.0
        %670 = vmatpush1.msra.mxu0 0.0
        %671 = vmatprep.subr.mxu0 0.0
        %672 = vmatpush1.msra.mxu0 0.0
        %673 = vmatprep.subr.mxu0 0.0
        %674 = vmatpush1.msra.mxu0 0.0
        %675 = vmatprep.subr.mxu0 0.0
        %676 = vmatpush1.msra.mxu0 0.0
        %677 = vmatprep.subr.mxu0 0.0
        %678 = vmatpush1.msra.mxu0 0.0
        %679 = vmatprep.subr.mxu0 0.0
        %680 = vmatpush1.msra.mxu0 0.0
        %681 = vmatprep.subr.mxu0 0.0
        %682 = vmatpush1.msra.mxu0 0.0
        %683 = vmatprep.subr.mxu0 0.0
        %684 = vmatpush1.msra.mxu0 0.0
        %685 = vmatprep.subr.mxu0 0.0
        %686 = vmatpush1.msra.mxu0 0.0
        %687 = vmatprep.mubr.f32.mxu0 0.0
        %688 = vmatmul.mubr.f32.gmra.mrb[0].mxu0 %v621
        %v689 = vpop.f32.mrb[0].mxu0
        %v690 = vadd.f32 %v619, %v689
        %v691 = vpop.f32.mrb[0].mxu0
        %692 = vdwg.mxu0
        %vm693 = vcmp.gt.f32.partialorder %v690, 20.0
        %v694 = vmin.f32 %v690, 20.0
        %v695 = vmul.f32 %v694, 1.442695
        %v696 = vpow.pop %v695
        %v697 = vadd.f32 %v696, 1.0
        %v698 = vlog2.pop %v697
        %v699 = vmul.f32 %v698, 0.6931472
        %v700 = vmul.f32 -0.5, %v696
        %v701 = vadd.f32 %v700, 1.0
        %v702 = vmul.f32 %v701, %v696
        %v703 = vand.u32 2147483647, %v696
        %vm704 = vcmp.lt.f32.partialorder %v703, 0.0004427343
        %v705 = vsel %vm704, %v702, %v699
        %v706 = vsel %vm693, %v690, %v705
        %s707 = smul.u32 %s22, 128
        %v708 = vlaneseq
        %v709 = vand.u32 %v708, 127
        %v710 = vstv %s707
        %v711 = vadd.s32 %v710, %v709
        %v712 = vcvt.s32.f32 %v711
        %v713 = vadd.f32 %v712, 0.5
        %v714 = vmul.f32 %v713, 0.25
        %v715 = vfloor.f32 %v714
        %v716 = vcvt.f32.s32.to.zero.pseudo %v715
        %v717 = vmul.u32 %v716, 4
        %vm718 = vcmp.gt.s32.totalorder %v717, %v711
        %v719 = vsel %vm718, 1, 0
        %v720 = vsub.s32 %v716, %v719
        %v721 = vadd.s32 %v720, 1
        %v722 = vmul.u32 %v721, 4
        %vm723 = vcmp.le.s32.totalorder %v722, %v711
        %v724 = vsel %vm723, 1, 0
        %v725 = vadd.s32 %v720, %v724
        %v726 = vmul.u32 %v725, 4
        %v727 = vsub.s32 %v711, %v726
        %v728 = vcvt.s32.f32 %v726
        %v729 = vmul.u32 %v727, 4
        %v730 = vcvt.s32.f32 %v729
        %732 = vset.pattern.permute.xlu0 0
        %733 = vperm.xlu0 %732, %v209
        %v734 = vpop.permute.xlu0 %733
        %v736 = vsub.f32 %v730, %v734
        %v737 = vsub.f32 %v728, %v734
        %v738 = vmul.f32 %v736, %v736
        %v739 = vmul.f32 %v737, %v737
        %v741 = vrot.slane %v739, 4
        %v743 = vadd.f32 %v738, %v741
        %v744 = vrsqrt.pop %v743
        %v745 = vmul.f32 %v743, %v744
        %vm746 = vcmp.eq.f32.partialorder %v743, inf
        %v747 = vsel %vm746, %v743, %v745
        %vm748 = vcmp.eq.f32.partialorder %v743, 0.0
        %v749 = vand.u32 %v743, 2147483648
        %v750 = vsel %vm748, %v749, %v747
        %v751 = vld [vmem:[%s2 + $0x40] sm:$0xff]
        %v752 = vld [vmem:[%s2 + $0x48] sm:$0xff]
        %v753 = vld [vmem:[%s2 + $0x50] sm:$0xff]
        %v754 = vld [vmem:[%s2 + $0x58] sm:$0xff]
        %v756 = vrot.slane %v737, 4
        %vm757 = vcmask 31744
        %v759 = vsel %vm757, %v753, 0
        %v762 = vsel %vm757, %v754, 0
        %vm764 = vcmask 1043456
        %v765 = vsel %vm764, %v756, 0
        %767 = vmatprep.subr.mxu0 0.0
        %768 = vmatpush1.msra.mxu0 %v765
        %769 = vmatprep.subr.mxu0 0.0
        %770 = vmatpush1.msra.mxu0 0.0
        %771 = vmatprep.subr.mxu0 0.0
        %772 = vmatpush1.msra.mxu0 0.0
        %773 = vmatprep.subr.mxu0 0.0
        %774 = vmatpush1.msra.mxu0 0.0
        %775 = vmatprep.subr.mxu0 0.0
        %776 = vmatpush1.msra.mxu0 0.0
        %777 = vmatprep.subr.mxu0 0.0
        %778 = vmatpush1.msra.mxu0 0.0
        %779 = vmatprep.subr.mxu0 0.0
        %780 = vmatpush1.msra.mxu0 0.0
        %781 = vmatprep.subr.mxu0 0.0
        %782 = vmatpush1.msra.mxu0 0.0
        %783 = vmatprep.subr.mxu0 0.0
        %784 = vmatpush1.msra.mxu0 0.0
        %785 = vmatprep.subr.mxu0 0.0
        %786 = vmatpush1.msra.mxu0 0.0
        %787 = vmatprep.subr.mxu0 0.0
        %788 = vmatpush1.msra.mxu0 0.0
        %789 = vmatprep.subr.mxu0 0.0
        %790 = vmatpush1.msra.mxu0 0.0
        %791 = vmatprep.subr.mxu0 0.0
        %792 = vmatpush1.msra.mxu0 0.0
        %793 = vmatprep.subr.mxu0 0.0
        %794 = vmatpush1.msra.mxu0 0.0
        %795 = vmatprep.subr.mxu0 0.0
        %796 = vmatpush1.msra.mxu0 0.0
        %797 = vmatprep.subr.mxu0 0.0
        %798 = vmatpush1.msra.mxu0 0.0
        %799 = vmatprep.subr.mxu0 0.0
        %800 = vmatpush1.msra.mxu0 0.0
        %801 = vmatprep.subr.mxu0 0.0
        %802 = vmatpush1.msra.mxu0 0.0
        %803 = vmatprep.subr.mxu0 0.0
        %804 = vmatpush1.msra.mxu0 0.0
        %805 = vmatprep.subr.mxu0 0.0
        %806 = vmatpush1.msra.mxu0 0.0
        %807 = vmatprep.subr.mxu0 0.0
        %808 = vmatpush1.msra.mxu0 0.0
        %809 = vmatprep.subr.mxu0 0.0
        %810 = vmatpush1.msra.mxu0 0.0
        %811 = vmatprep.subr.mxu0 0.0
        %812 = vmatpush1.msra.mxu0 0.0
        %813 = vmatprep.subr.mxu0 0.0
        %814 = vmatpush1.msra.mxu0 0.0
        %815 = vmatprep.subr.mxu0 0.0
        %816 = vmatpush1.msra.mxu0 0.0
        %817 = vmatprep.subr.mxu0 0.0
        %818 = vmatpush1.msra.mxu0 0.0
        %819 = vmatprep.subr.mxu0 0.0
        %820 = vmatpush1.msra.mxu0 0.0
        %821 = vmatprep.subr.mxu0 0.0
        %822 = vmatpush1.msra.mxu0 0.0
        %823 = vmatprep.subr.mxu0 0.0
        %824 = vmatpush1.msra.mxu0 0.0
        %825 = vmatprep.subr.mxu0 0.0
        %826 = vmatpush1.msra.mxu0 0.0
        %827 = vmatprep.subr.mxu0 0.0
        %828 = vmatpush1.msra.mxu0 0.0
        %829 = vmatprep.subr.mxu0 0.0
        %830 = vmatpush1.msra.mxu0 0.0
        %831 = vmatprep.mubr.f32.mxu0 0.0
        %832 = vmatmul.mubr.f32.gmra.mrb[0].mxu0 %v759
        %v833 = vpop.f32.mrb[0].mxu0
        %v834 = vadd.f32 0.0, %v833
        %v835 = vpop.f32.mrb[0].mxu0
        %836 = vmatprep.mubr.f32.mxu0 0.0
        %837 = vmatmul.mubr.f32.gmra.mrb[0].mxu0 %v762
        %v838 = vpop.f32.mrb[0].mxu0
        %v839 = vadd.f32 0.0, %v838
        %v840 = vpop.f32.mrb[0].mxu0
        %841 = vdwg.mxu0
        %v843 = vsel %vm757, %v751, 0
        %v846 = vsel %vm757, %v752, 0
        %v849 = vsel %vm764, %v736, 0
        %851 = vmatprep.subr.mxu0 0.0
        %852 = vmatpush1.msra.mxu0 %v849
        %853 = vmatprep.subr.mxu0 0.0
        %854 = vmatpush1.msra.mxu0 0.0
        %855 = vmatprep.subr.mxu0 0.0
        %856 = vmatpush1.msra.mxu0 0.0
        %857 = vmatprep.subr.mxu0 0.0
        %858 = vmatpush1.msra.mxu0 0.0
        %859 = vmatprep.subr.mxu0 0.0
        %860 = vmatpush1.msra.mxu0 0.0
        %861 = vmatprep.subr.mxu0 0.0
        %862 = vmatpush1.msra.mxu0 0.0
        %863 = vmatprep.subr.mxu0 0.0
        %864 = vmatpush1.msra.mxu0 0.0
        %865 = vmatprep.subr.mxu0 0.0
        %866 = vmatpush1.msra.mxu0 0.0
        %867 = vmatprep.subr.mxu0 0.0
        %868 = vmatpush1.msra.mxu0 0.0
        %869 = vmatprep.subr.mxu0 0.0
        %870 = vmatpush1.msra.mxu0 0.0
        %871 = vmatprep.subr.mxu0 0.0
        %872 = vmatpush1.msra.mxu0 0.0
        %873 = vmatprep.subr.mxu0 0.0
        %874 = vmatpush1.msra.mxu0 0.0
        %875 = vmatprep.subr.mxu0 0.0
        %876 = vmatpush1.msra.mxu0 0.0
        %877 = vmatprep.subr.mxu0 0.0
        %878 = vmatpush1.msra.mxu0 0.0
        %879 = vmatprep.subr.mxu0 0.0
        %880 = vmatpush1.msra.mxu0 0.0
        %881 = vmatprep.subr.mxu0 0.0
        %882 = vmatpush1.msra.mxu0 0.0
        %883 = vmatprep.subr.mxu0 0.0
        %884 = vmatpush1.msra.mxu0 0.0
        %885 = vmatprep.subr.mxu0 0.0
        %886 = vmatpush1.msra.mxu0 0.0
        %887 = vmatprep.subr.mxu0 0.0
        %888 = vmatpush1.msra.mxu0 0.0
        %889 = vmatprep.subr.mxu0 0.0
        %890 = vmatpush1.msra.mxu0 0.0
        %891 = vmatprep.subr.mxu0 0.0
        %892 = vmatpush1.msra.mxu0 0.0
        %893 = vmatprep.subr.mxu0 0.0
        %894 = vmatpush1.msra.mxu0 0.0
        %895 = vmatprep.subr.mxu0 0.0
        %896 = vmatpush1.msra.mxu0 0.0
        %897 = vmatprep.subr.mxu0 0.0
        %898 = vmatpush1.msra.mxu0 0.0
        %899 = vmatprep.subr.mxu0 0.0
        %900 = vmatpush1.msra.mxu0 0.0
        %901 = vmatprep.subr.mxu0 0.0
        %902 = vmatpush1.msra.mxu0 0.0
        %903 = vmatprep.subr.mxu0 0.0
        %904 = vmatpush1.msra.mxu0 0.0
        %905 = vmatprep.subr.mxu0 0.0
        %906 = vmatpush1.msra.mxu0 0.0
        %907 = vmatprep.subr.mxu0 0.0
        %908 = vmatpush1.msra.mxu0 0.0
        %909 = vmatprep.subr.mxu0 0.0
        %910 = vmatpush1.msra.mxu0 0.0
        %911 = vmatprep.subr.mxu0 0.0
        %912 = vmatpush1.msra.mxu0 0.0
        %913 = vmatprep.subr.mxu0 0.0
        %914 = vmatpush1.msra.mxu0 0.0
        %915 = vmatprep.mubr.f32.mxu0 0.0
        %916 = vmatmul.mubr.f32.gmra.mrb[0].mxu0 %v843
        %v917 = vpop.f32.mrb[0].mxu0
        %v918 = vadd.f32 %v834, %v917
        %v919 = vpop.f32.mrb[0].mxu0
        %920 = vmatprep.mubr.f32.mxu0 0.0
        %921 = vmatmul.mubr.f32.gmra.mrb[0].mxu0 %v846
        %v922 = vpop.f32.mrb[0].mxu0
        %v923 = vadd.f32 %v839, %v922
        %v924 = vpop.f32.mrb[0].mxu0
        %925 = vdwg.mxu0
        %v926 = vld [vmem:[%s2 + $0x60] sm:$0xff]
        %v927 = vld [vmem:[%s2 + $0x68] sm:$0xff]
        %v929 = vsel %vm757, %v926, 0
        %v932 = vsel %vm757, %v927, 0
        %v935 = vsel %vm764, %v750, 0
        %937 = vmatprep.subr.mxu0 0.0
        %938 = vmatpush1.msra.mxu0 %v935
        %939 = vmatprep.subr.mxu0 0.0
        %940 = vmatpush1.msra.mxu0 0.0
        %941 = vmatprep.subr.mxu0 0.0
        %942 = vmatpush1.msra.mxu0 0.0
        %943 = vmatprep.subr.mxu0 0.0
        %944 = vmatpush1.msra.mxu0 0.0
        %945 = vmatprep.subr.mxu0 0.0
        %946 = vmatpush1.msra.mxu0 0.0
        %947 = vmatprep.subr.mxu0 0.0
        %948 = vmatpush1.msra.mxu0 0.0
        %949 = vmatprep.subr.mxu0 0.0
        %950 = vmatpush1.msra.mxu0 0.0
        %951 = vmatprep.subr.mxu0 0.0
        %952 = vmatpush1.msra.mxu0 0.0
        %953 = vmatprep.subr.mxu0 0.0
        %954 = vmatpush1.msra.mxu0 0.0
        %955 = vmatprep.subr.mxu0 0.0
        %956 = vmatpush1.msra.mxu0 0.0
        %957 = vmatprep.subr.mxu0 0.0
        %958 = vmatpush1.msra.mxu0 0.0
        %959 = vmatprep.subr.mxu0 0.0
        %960 = vmatpush1.msra.mxu0 0.0
        %961 = vmatprep.subr.mxu0 0.0
        %962 = vmatpush1.msra.mxu0 0.0
        %963 = vmatprep.subr.mxu0 0.0
        %964 = vmatpush1.msra.mxu0 0.0
        %965 = vmatprep.subr.mxu0 0.0
        %966 = vmatpush1.msra.mxu0 0.0
        %967 = vmatprep.subr.mxu0 0.0
        %968 = vmatpush1.msra.mxu0 0.0
        %969 = vmatprep.subr.mxu0 0.0
        %970 = vmatpush1.msra.mxu0 0.0
        %971 = vmatprep.subr.mxu0 0.0
        %972 = vmatpush1.msra.mxu0 0.0
        %973 = vmatprep.subr.mxu0 0.0
        %974 = vmatpush1.msra.mxu0 0.0
        %975 = vmatprep.subr.mxu0 0.0
        %976 = vmatpush1.msra.mxu0 0.0
        %977 = vmatprep.subr.mxu0 0.0
        %978 = vmatpush1.msra.mxu0 0.0
        %979 = vmatprep.subr.mxu0 0.0
        %980 = vmatpush1.msra.mxu0 0.0
        %981 = vmatprep.subr.mxu0 0.0
        %982 = vmatpush1.msra.mxu0 0.0
        %983 = vmatprep.subr.mxu0 0.0
        %984 = vmatpush1.msra.mxu0 0.0
        %985 = vmatprep.subr.mxu0 0.0
        %986 = vmatpush1.msra.mxu0 0.0
        %987 = vmatprep.subr.mxu0 0.0
        %988 = vmatpush1.msra.mxu0 0.0
        %989 = vmatprep.subr.mxu0 0.0
        %990 = vmatpush1.msra.mxu0 0.0
        %991 = vmatprep.subr.mxu0 0.0
        %992 = vmatpush1.msra.mxu0 0.0
        %993 = vmatprep.subr.mxu0 0.0
        %994 = vmatpush1.msra.mxu0 0.0
        %995 = vmatprep.subr.mxu0 0.0
        %996 = vmatpush1.msra.mxu0 0.0
        %997 = vmatprep.subr.mxu0 0.0
        %998 = vmatpush1.msra.mxu0 0.0
        %999 = vmatprep.subr.mxu0 0.0
        %1000 = vmatpush1.msra.mxu0 0.0
        %1001 = vmatprep.mubr.f32.mxu0 0.0
        %1002 = vmatmul.mubr.f32.gmra.mrb[0].mxu0 %v929
        %v1003 = vpop.f32.mrb[0].mxu0
        %v1004 = vadd.f32 0.0, %v1003
        %v1005 = vpop.f32.mrb[0].mxu0
        %1006 = vmatprep.mubr.f32.mxu0 0.0
        %1007 = vmatmul.mubr.f32.gmra.mrb[0].mxu0 %v932
        %v1008 = vpop.f32.mrb[0].mxu0
        %v1009 = vadd.f32 0.0, %v1008
        %v1010 = vpop.f32.mrb[0].mxu0
        %1011 = vdwg.mxu0
        %v1012 = vadd.f32 %v918, %v1004
        %v1013 = vadd.f32 %v923, %v1009
        %1014 = vset.pattern.permute.xlu0 4
        %1015 = vperm.xlu0 %1014, %v751
        %v1016 = vpop.permute.xlu0 %1015
        %1018 = vset.pattern.permute.xlu0 4
        %1019 = vperm.xlu0 %1018, %v752
        %v1020 = vpop.permute.xlu0 %1019
        %v1022 = vadd.f32 %v1012, %v1016
        %v1023 = vadd.f32 %v1013, %v1020
        %vm1024 = vcmp.gt.f32.partialorder %v1022, 20.0
        %vm1025 = vcmp.gt.f32.partialorder %v1023, 20.0
        %v1026 = vmin.f32 %v1022, 20.0
        %v1027 = vmin.f32 %v1023, 20.0
        %v1028 = vmul.f32 %v1026, 1.442695
        %v1029 = vpow.pop %v1028
        %v1030 = vmul.f32 %v1027, 1.442695
        %v1031 = vpow.pop %v1030
        %v1032 = vadd.f32 %v1029, 1.0
        %v1033 = vlog2.pop %v1032
        %v1034 = vmul.f32 %v1033, 0.6931472
        %v1035 = vmul.f32 -0.5, %v1029
        %v1036 = vadd.f32 %v1035, 1.0
        %v1037 = vmul.f32 %v1036, %v1029
        %v1038 = vand.u32 2147483647, %v1029
        %vm1039 = vcmp.lt.f32.partialorder %v1038, 0.0004427343
        %v1040 = vsel %vm1039, %v1037, %v1034
        %v1041 = vadd.f32 %v1031, 1.0
        %v1042 = vlog2.pop %v1041
        %v1043 = vmul.f32 %v1042, 0.6931472
        %v1044 = vmul.f32 -0.5, %v1031
        %v1045 = vadd.f32 %v1044, 1.0
        %v1046 = vmul.f32 %v1045, %v1031
        %v1047 = vand.u32 2147483647, %v1031
        %vm1048 = vcmp.lt.f32.partialorder %v1047, 0.0004427343
        %v1049 = vsel %vm1048, %v1046, %v1043
        %v1050 = vsel %vm1024, %v1022, %v1040
        %v1051 = vsel %vm1025, %v1023, %v1049
        %v1052 = vld [vmem:[%s2 + $0x70] sm:$0xff]
        %v1053 = vld [vmem:[%s2 + $0x78] sm:$0xff]
        %1055 = vset.pattern.permute.xlu0 0
        %1056 = vperm.xlu0 %1055, %v1052
        %v1057 = vpop.permute.xlu0 %1056
        %1060 = vset.pattern.permute.xlu0 0
        %1061 = vperm.xlu0 %1060, %v1053
        %v1062 = vpop.permute.xlu0 %1061
        %v1064 = vlaneseq
        %v1065 = vshrl.u32 %v1064, 7
        %v1066 = vsub.s32 0, %v1065
        %v1067 = vrot.slane %v706, %v1066
        %v1068 = vmul.f32 %v1057, %v1067
        %v1069 = vmul.f32 %v1062, %v1067
        %v1070 = vld [vmem:[%s2 + $0x80] sm:$0xff]
        %v1071 = vld [vmem:[%s2 + $0x88] sm:$0xff]
        %v1073 = vsel %vm528, %v1070, 0
        %v1076 = vsel %vm528, %v1071, 0
        %1078 = vmatprep.subr.mxu0 0.0
        %1079 = vmatpush1.msra.mxu0 %v1050
        %1080 = vmatprep.subr.mxu0 0.0
        %1081 = vmatpush1.msra.mxu0 %v1051
        %1082 = vmatprep.subr.mxu0 0.0
        %1083 = vmatpush1.msra.mxu0 0.0
        %1084 = vmatprep.subr.mxu0 0.0
        %1085 = vmatpush1.msra.mxu0 0.0
        %1086 = vmatprep.subr.mxu0 0.0
        %1087 = vmatpush1.msra.mxu0 0.0
        %1088 = vmatprep.subr.mxu0 0.0
        %1089 = vmatpush1.msra.mxu0 0.0
        %1090 = vmatprep.subr.mxu0 0.0
        %1091 = vmatpush1.msra.mxu0 0.0
        %1092 = vmatprep.subr.mxu0 0.0
        %1093 = vmatpush1.msra.mxu0 0.0
        %1094 = vmatprep.subr.mxu0 0.0
        %1095 = vmatpush1.msra.mxu0 0.0
        %1096 = vmatprep.subr.mxu0 0.0
        %1097 = vmatpush1.msra.mxu0 0.0
        %1098 = vmatprep.subr.mxu0 0.0
        %1099 = vmatpush1.msra.mxu0 0.0
        %1100 = vmatprep.subr.mxu0 0.0
        %1101 = vmatpush1.msra.mxu0 0.0
        %1102 = vmatprep.subr.mxu0 0.0
        %1103 = vmatpush1.msra.mxu0 0.0
        %1104 = vmatprep.subr.mxu0 0.0
        %1105 = vmatpush1.msra.mxu0 0.0
        %1106 = vmatprep.subr.mxu0 0.0
        %1107 = vmatpush1.msra.mxu0 0.0
        %1108 = vmatprep.subr.mxu0 0.0
        %1109 = vmatpush1.msra.mxu0 0.0
        %1110 = vmatprep.subr.mxu0 0.0
        %1111 = vmatpush1.msra.mxu0 0.0
        %1112 = vmatprep.subr.mxu0 0.0
        %1113 = vmatpush1.msra.mxu0 0.0
        %1114 = vmatprep.subr.mxu0 0.0
        %1115 = vmatpush1.msra.mxu0 0.0
        %1116 = vmatprep.subr.mxu0 0.0
        %1117 = vmatpush1.msra.mxu0 0.0
        %1118 = vmatprep.subr.mxu0 0.0
        %1119 = vmatpush1.msra.mxu0 0.0
        %1120 = vmatprep.subr.mxu0 0.0
        %1121 = vmatpush1.msra.mxu0 0.0
        %1122 = vmatprep.subr.mxu0 0.0
        %1123 = vmatpush1.msra.mxu0 0.0
        %1124 = vmatprep.subr.mxu0 0.0
        %1125 = vmatpush1.msra.mxu0 0.0
        %1126 = vmatprep.subr.mxu0 0.0
        %1127 = vmatpush1.msra.mxu0 0.0
        %1128 = vmatprep.subr.mxu0 0.0
        %1129 = vmatpush1.msra.mxu0 0.0
        %1130 = vmatprep.subr.mxu0 0.0
        %1131 = vmatpush1.msra.mxu0 0.0
        %1132 = vmatprep.subr.mxu0 0.0
        %1133 = vmatpush1.msra.mxu0 0.0
        %1134 = vmatprep.subr.mxu0 0.0
        %1135 = vmatpush1.msra.mxu0 0.0
        %1136 = vmatprep.subr.mxu0 0.0
        %1137 = vmatpush1.msra.mxu0 0.0
        %1138 = vmatprep.subr.mxu0 0.0
        %1139 = vmatpush1.msra.mxu0 0.0
        %1140 = vmatprep.subr.mxu0 0.0
        %1141 = vmatpush1.msra.mxu0 0.0
        %1142 = vmatprep.mubr.f32.mxu0 0.0
        %1143 = vmatmul.mubr.f32.gmra.mrb[0].mxu0 %v1073
        %v1144 = vpop.f32.mrb[0].mxu0
        %v1145 = vadd.f32 0.0, %v1144
        %v1146 = vpop.f32.mrb[0].mxu0
        %1147 = vmatprep.mubr.f32.mxu0 0.0
        %1148 = vmatmul.mubr.f32.gmra.mrb[0].mxu0 %v1076
        %v1149 = vpop.f32.mrb[0].mxu0
        %v1150 = vadd.f32 0.0, %v1149
        %v1151 = vpop.f32.mrb[0].mxu0
        %1152 = vdwg.mxu0
        %v1153 = vadd.f32 %v1068, %v1145
        %v1154 = vadd.f32 %v1069, %v1150
        %1155 = vset.pattern.permute.xlu0 1
        %1156 = vperm.xlu0 %1155, %v1052
        %v1157 = vpop.permute.xlu0 %1156
        %1159 = vset.pattern.permute.xlu0 1
        %1160 = vperm.xlu0 %1159, %v1053
        %v1161 = vpop.permute.xlu0 %1160
        %v1163 = vadd.f32 %v1153, %v1157
        %v1164 = vadd.f32 %v1154, %v1161
        %vm1165 = vcmp.gt.f32.partialorder %v1163, 20.0
        %vm1166 = vcmp.gt.f32.partialorder %v1164, 20.0
        %v1167 = vmin.f32 %v1163, 20.0
        %v1168 = vmin.f32 %v1164, 20.0
        %v1169 = vmul.f32 %v1167, 1.442695
        %v1170 = vpow.pop %v1169
        %v1171 = vmul.f32 %v1168, 1.442695
        %v1172 = vpow.pop %v1171
        %v1173 = vadd.f32 %v1170, 1.0
        %v1174 = vlog2.pop %v1173
        %v1175 = vmul.f32 %v1174, 0.6931472
        %v1176 = vmul.f32 -0.5, %v1170
        %v1177 = vadd.f32 %v1176, 1.0
        %v1178 = vmul.f32 %v1177, %v1170
        %v1179 = vand.u32 2147483647, %v1170
        %vm1180 = vcmp.lt.f32.partialorder %v1179, 0.0004427343
        %v1181 = vsel %vm1180, %v1178, %v1175
        %v1182 = vadd.f32 %v1172, 1.0
        %v1183 = vlog2.pop %v1182
        %v1184 = vmul.f32 %v1183, 0.6931472
        %v1185 = vmul.f32 -0.5, %v1172
        %v1186 = vadd.f32 %v1185, 1.0
        %v1187 = vmul.f32 %v1186, %v1172
        %v1188 = vand.u32 2147483647, %v1172
        %vm1189 = vcmp.lt.f32.partialorder %v1188, 0.0004427343
        %v1190 = vsel %vm1189, %v1187, %v1184
        %v1191 = vsel %vm1165, %v1163, %v1181
        %v1192 = vsel %vm1166, %v1164, %v1190
        %v1193 = vld [vmem:[%s2 + $0x90] sm:$0x1]
        %1195 = vset.pattern.permute.xlu0 16
        %1196 = vperm.xlu0 %1195, %v1193
        %v1197 = vpop.permute.xlu0 %1196
        %v1199 = vsel %vm528, %v1193, 0
        %1201 = vmatprep.subr.mxu0 0.0
        %1202 = vmatpush1.msra.mxu0 %v1191
        %1203 = vmatprep.subr.mxu0 0.0
        %1204 = vmatpush1.msra.mxu0 %v1192
        %1205 = vmatprep.subr.mxu0 0.0
        %1206 = vmatpush1.msra.mxu0 0.0
        %1207 = vmatprep.subr.mxu0 0.0
        %1208 = vmatpush1.msra.mxu0 0.0
        %1209 = vmatprep.subr.mxu0 0.0
        %1210 = vmatpush1.msra.mxu0 0.0
        %1211 = vmatprep.subr.mxu0 0.0
        %1212 = vmatpush1.msra.mxu0 0.0
        %1213 = vmatprep.subr.mxu0 0.0
        %1214 = vmatpush1.msra.mxu0 0.0
        %1215 = vmatprep.subr.mxu0 0.0
        %1216 = vmatpush1.msra.mxu0 0.0
        %1217 = vmatprep.subr.mxu0 0.0
        %1218 = vmatpush1.msra.mxu0 0.0
        %1219 = vmatprep.subr.mxu0 0.0
        %1220 = vmatpush1.msra.mxu0 0.0
        %1221 = vmatprep.subr.mxu0 0.0
        %1222 = vmatpush1.msra.mxu0 0.0
        %1223 = vmatprep.subr.mxu0 0.0
        %1224 = vmatpush1.msra.mxu0 0.0
        %1225 = vmatprep.subr.mxu0 0.0
        %1226 = vmatpush1.msra.mxu0 0.0
        %1227 = vmatprep.subr.mxu0 0.0
        %1228 = vmatpush1.msra.mxu0 0.0
        %1229 = vmatprep.subr.mxu0 0.0
        %1230 = vmatpush1.msra.mxu0 0.0
        %1231 = vmatprep.subr.mxu0 0.0
        %1232 = vmatpush1.msra.mxu0 0.0
        %1233 = vmatprep.subr.mxu0 0.0
        %1234 = vmatpush1.msra.mxu0 0.0
        %1235 = vmatprep.subr.mxu0 0.0
        %1236 = vmatpush1.msra.mxu0 0.0
        %1237 = vmatprep.subr.mxu0 0.0
        %1238 = vmatpush1.msra.mxu0 0.0
        %1239 = vmatprep.subr.mxu0 0.0
        %1240 = vmatpush1.msra.mxu0 0.0
        %1241 = vmatprep.subr.mxu0 0.0
        %1242 = vmatpush1.msra.mxu0 0.0
        %1243 = vmatprep.subr.mxu0 0.0
        %1244 = vmatpush1.msra.mxu0 0.0
        %1245 = vmatprep.subr.mxu0 0.0
        %1246 = vmatpush1.msra.mxu0 0.0
        %1247 = vmatprep.subr.mxu0 0.0
        %1248 = vmatpush1.msra.mxu0 0.0
        %1249 = vmatprep.subr.mxu0 0.0
        %1250 = vmatpush1.msra.mxu0 0.0
        %1251 = vmatprep.subr.mxu0 0.0
        %1252 = vmatpush1.msra.mxu0 0.0
        %1253 = vmatprep.subr.mxu0 0.0
        %1254 = vmatpush1.msra.mxu0 0.0
        %1255 = vmatprep.subr.mxu0 0.0
        %1256 = vmatpush1.msra.mxu0 0.0
        %1257 = vmatprep.subr.mxu0 0.0
        %1258 = vmatpush1.msra.mxu0 0.0
        %1259 = vmatprep.subr.mxu0 0.0
        %1260 = vmatpush1.msra.mxu0 0.0
        %1261 = vmatprep.subr.mxu0 0.0
        %1262 = vmatpush1.msra.mxu0 0.0
        %1263 = vmatprep.subr.mxu0 0.0
        %1264 = vmatpush1.msra.mxu0 0.0
        %1265 = vmatprep.mubr.f32.mxu0 0.0
        %1266 = vmatmul.mubr.f32.gmra.mrb[0].mxu0 %v1199
        %v1267 = vpop.f32.mrb[0].mxu0
        %v1268 = vadd.f32 %v1197, %v1267
        %v1269 = vpop.f32.mrb[0].mxu0
        %1270 = vdwg.mxu0
        %1271 = vst [vmem:[%s195] sm:$0x1] %v1268
        %s1272 = sand.u32 %s114, 1
        %s1273 = scalar_lea.sflag [#allocation3], %s1272
        %s1274 = sand.u32 %s114, 1
        %s1275 = scalar_lea.vmem [#allocation2], %s1274
        // Predicated region
        $region33: #{tpu_custom_call.1} parent=31 // pred_check
          %p1276 = pneg %p124
        $region34: #{tpu_custom_call.1} parent=31 // pred_check_branch
          %1278 = sbr.rel (%p1276) target = $region36
        $region35: #{tpu_custom_call.1} parent=31 // pred_region
          %s1280 = ssub.s32 16, 16
          %1281 = vsyncadd %s1273, %s1280
          %s1282 = sadd.s32 %s22, %s21
          %s1283 = smul.addr %s1282, 16
          %s1284 = scalar_lea.hbm %s3, %s1283
          %s1286 = sshll.u32 %s1275, 4
          %s1287 = int_to_ptr.vmem [resolvable:$true] %s1286
          %1289 = dma.vmem_to_hbm [thread:$0]  %s1287, 16, %s1284, %s1273
        $region36: #{tpu_custom_call.1} parent=31 // pred_fallthru
          _
      $region32: #{tpu_custom_call.1} parent=5 // pred_fallthru
        _
      %p1290 = scmp.le.s32.totalorder 2, %s12
      // Predicated region
      $region37: #{tpu_custom_call.1} parent=5 // pred_check
        %p1291 = pneg %p1290
      $region38: #{tpu_custom_call.1} parent=5 // pred_check_branch
        %1293 = sbr.rel (%p1291) target = $region40
      $region39: #{tpu_custom_call.1} parent=5 // pred_region
        %s1294 = ssub.s32 %s12, 2
        // Predicated region
        $region41: #{tpu_custom_call.1} parent=39 // pred_check
          %p1295 = pneg %p130
        $region42: #{tpu_custom_call.1} parent=39 // pred_check_branch
          %1297 = sbr.rel (%p1295) target = $region44
        $region43: #{tpu_custom_call.1} parent=39 // pred_region
          %s1298 = sand.u32 %s115, 1
          %s1299 = scalar_lea.sflag [#allocation3], %s1298
          %s1300 = sand.u32 %s115, 1
          %s1301 = scalar_lea.vmem [#allocation2], %s1300
          %1302 = dma.done %s1299, 16
        $region44: #{tpu_custom_call.1} parent=39 // pred_fallthru
          _
      $region40: #{tpu_custom_call.1} parent=5 // pred_fallthru
        _
    $region6: #{tpu_custom_call.1} parent=1 // loop_footer
      %s16 = sadd.s32 1, %s12
    $region7: #{tpu_custom_call.1} parent=1 // loop_footer_branch
      %11 = sbr.rel target = $region3
    $region8: #{tpu_custom_call.1} parent=1 // loop_exit
      _
    %1303 = vsyncpa [#allocation3], 1
    %s1304 = scalar_lea.sflag [#allocation3], 1
    %1305 = vsyncpa %s1304, 1

</llo_original>
